<compile_context>
chip_gen: v7x
topology: tpu7x:2x2x1
jax: 0.10.0
libtpu: 0.0.40
codegen_flags: <defaults>
</compile_context>

<pallas_src>
import numpy as np

import jax
import jax.numpy as jnp
from jax.experimental import pallas as pl
from jax.experimental.pallas import tpu as pltpu


# -----------------------------------------------------------------------------
# host-side weight folding helpers (pure numpy, called ONCE at setup time)
# -----------------------------------------------------------------------------
def fold_conv_weight(k_hwio, Wsp):
    """Fold a (3,3,Cin,Cout) HWIO kernel into a (3*Wsp*Cin, Wsp*Cout) matrix.

    Row index = dy*Wsp*Cin + wi*Cin + ci  (input row offset dy-1, column wi, chan ci)
    Col index = wo*Cout + co
    Entry     = K[dy, wi-wo+1, ci, co] when |wi-wo| <= 1, else 0.
    The zero off-band blocks implement the 'same' zero padding along W.
    """
    k = np.asarray(k_hwio, np.float32)
    _, _, cin, cout = k.shape
    wf = np.zeros((3, Wsp, cin, Wsp, cout), np.float32)
    for dy in range(3):
        for dx in range(3):
            for wo in range(Wsp):
                wi = wo + dx - 1
                if 0 <= wi < Wsp:
                    wf[dy, wi, :, wo, :] = k[dy, dx]
    return wf.reshape(3 * Wsp * cin, Wsp * cout)


def channel_fold_matrices(c, Wsp):
    """0/1 matrices mapping the folded lane layout (w*c + ch) <-> channels."""
    eye = np.eye(c, dtype=np.float32)
    gather = np.tile(eye, (Wsp, 1))     # (Wsp*c, c): sum the W groups per channel
    scatter = np.tile(eye, (1, Wsp))    # (c, Wsp*c): broadcast channel -> lanes
    return gather, scatter


def fold_convblock_params(params, Wsp, *, mxu_dtype=jnp.bfloat16):
    """One-time parameter folding. Call at setup, NOT per forward."""
    cin, cout = params["c1w_hwio"].shape[2], params["c1w_hwio"].shape[3]
    gout_np, goutT_np = channel_fold_matrices(cout, Wsp)
    _, ginT_np = channel_fold_matrices(cin, Wsp)
    return {
        "l1w": jnp.asarray(params["l1w"], mxu_dtype),
        "l1b": jnp.asarray(params["l1b"], jnp.float32),
        "l2w": jnp.asarray(params["l2w"], mxu_dtype),
        "l2b": jnp.asarray(params["l2b"], jnp.float32),
        "ginT": jnp.asarray(ginT_np, jnp.float32),
        "w1": jnp.asarray(fold_conv_weight(params["c1w_hwio"], Wsp), mxu_dtype),
        "g1": jnp.asarray(params["g1"], jnp.float32),
        "b1": jnp.asarray(params["b1"], jnp.float32),
        "w2": jnp.asarray(fold_conv_weight(params["c2w_hwio"], Wsp), mxu_dtype),
        "g2": jnp.asarray(params["g2"], jnp.float32),
        "b2": jnp.asarray(params["b2"], jnp.float32),
        "gout": jnp.asarray(gout_np, jnp.float32),
        "goutT": jnp.asarray(goutT_np, jnp.float32),
    }


# -----------------------------------------------------------------------------
# Pallas kernel
# -----------------------------------------------------------------------------
def convblock_kernel(x_ref, v_ref,
                     l1w_ref, l1b_ref, l2w_ref, l2b_ref,
                     ginT_ref,
                     w1_ref, g1_ref, b1_ref,
                     w2_ref, g2_ref, b2_ref,
                     gout_ref, goutT_ref,
                     y_ref):
    N, H, _ = x_ref.shape
    wc_out = y_ref.shape[-1]
    cout = gout_ref.shape[-1]
    Wsp = wc_out // cout
    eps = 1e-5
    cdt = w1_ref.dtype            # MXU operand dtype (bf16 default; f32 = exact path)

    # ---- positional-encoding MLP: v2 = lin2(relu(lin1(v))) ----
    v = v_ref[...].astype(cdt)
    v1 = jnp.dot(v, l1w_ref[...], preferred_element_type=jnp.float32) + l1b_ref[...]
    v1 = jnp.maximum(v1, 0.0)
    v2 = jnp.dot(v1.astype(cdt), l2w_ref[...],
                 preferred_element_type=jnp.float32) + l2b_ref[...]        # (N, Cin) f32

    # ---- h = x + v2 broadcast over (H, W); lane layout is (w, channel) ----
    v2_f = jnp.dot(v2, ginT_ref[...], preferred_element_type=jnp.float32)  # (N, W*Cin)
    h = x_ref[...] + v2_f[:, None, :]                                      # (N, H, W*Cin)

    gout = gout_ref[...]          # (W*Cout, Cout): lane-group -> channel reduce
    goutT = goutT_ref[...]        # (Cout, W*Cout): channel -> lane-group broadcast
    inv_cnt = 1.0 / float(N * H * Wsp)

    def conv_bn_relu(a, w_ref, g_ref, b_ref):
        wc = a.shape[-1]
        # im2col in the folded (w*c) lane layout, built in the MXU operand dtype:
        # only the H halo needs explicit zeros; the W-direction 'same' padding
        # lives in the block-banded weight, so all 9 taps collapse into ONE
        # MXU matmul.
        a_c = a.astype(cdt)
        zrow = jnp.zeros((N, 1, wc), cdt)
        up = jnp.concatenate([zrow, a_c[:, :H - 1, :]], axis=1)   # input rows h-1
        dn = jnp.concatenate([a_c[:, 1:, :], zrow], axis=1)       # input rows h+1
        patch = jnp.concatenate([up, a_c, dn], axis=-1)           # (N, H, 3*wc)
        patch = patch.reshape(N * H, 3 * wc)

        # conv bias intentionally omitted: training-mode BN subtracts the batch
        # mean, which cancels a per-channel bias exactly.
        acc = jnp.dot(patch, w_ref[...],
                      preferred_element_type=jnp.float32)         # (N*H, W*Cout) f32

        # one-pass training-mode BatchNorm (biased variance, eps = 1e-5):
        # VPU row-reduce first, then a single tiny fold matmul for [sum; sumsq].
        row_stats = jnp.concatenate(
            [jnp.sum(acc, axis=0, keepdims=True),
             jnp.sum(acc * acc, axis=0, keepdims=True)], axis=0)  # (2, W*Cout)
        ch_stats = jnp.dot(row_stats, gout,
                           preferred_element_type=jnp.float32) * inv_cnt   # (2, Cout)
        mean = ch_stats[0:1]
        var = jnp.maximum(ch_stats[1:2] - mean * mean, 0.0)       # clamp: no NaN rsqrt
        scale = g_ref[...] * jax.lax.rsqrt(var + eps)             # (1, Cout)
        shift = b_ref[...] - mean * scale                         # (1, Cout)
        # fused broadcast-back: one (2, Cout) x (Cout, W*Cout) matmul.
        ss = jnp.concatenate([scale, shift], axis=0)              # (2, Cout)
        ss_f = jnp.dot(ss, goutT, preferred_element_type=jnp.float32)      # (2, W*Cout)
        return jnp.maximum(acc * ss_f[0:1] + ss_f[1:2], 0.0)      # (N*H, W*Cout)

    h1 = conv_bn_relu(h, w1_ref, g1_ref, b1_ref).reshape(N, H, wc_out)
    y = conv_bn_relu(h1, w2_ref, g2_ref, b2_ref)
    y_ref[...] = y.reshape(N, H, wc_out)


# -----------------------------------------------------------------------------
# wrapper: NCHW <-> folded lane-dense layout; params are pre-folded at setup
# -----------------------------------------------------------------------------
def convblock_forward(x_nchw, v, folded):
    N, Cin, H, Wsp = x_nchw.shape
    Cout = folded["g1"].shape[-1]

    # NCHW -> NHWC -> folded (N, H, W*Cin)
    x_fold = jnp.transpose(x_nchw, (0, 2, 3, 1)).reshape(N, H, Wsp * Cin)

    args = (x_fold, v.astype(jnp.float32),
            folded["l1w"], folded["l1b"], folded["l2w"], folded["l2b"],
            folded["ginT"],
            folded["w1"], folded["g1"], folded["b1"],
            folded["w2"], folded["g2"], folded["b2"],
            folded["gout"], folded["goutT"])

    vmem = pl.BlockSpec(memory_space=pltpu.MemorySpace.VMEM)
    y_fold = pl.pallas_call(
        convblock_kernel,
        out_shape=jax.ShapeDtypeStruct((N, H, Wsp * Cout), jnp.float32),
        in_specs=[vmem] * len(args),
        out_specs=vmem,
        # KB-scale buffers at toy shapes; re-derive per generation (v7x: 64 MiB
        # physical, leave headroom) when the tiled version lands.
        compiler_params=pltpu.CompilerParams(vmem_limit_bytes=32 * 1024 * 1024),
    )(*args)

    # unfold: (N, H, W*Cout) -> (N, Cout, H, W)
    return jnp.transpose(y_fold.reshape(N, H, Wsp, Cout), (0, 3, 1, 2))


# -----------------------------------------------------------------------------
# pure-JAX reference mirroring the PyTorch module (NCHW, training-mode BN)
# -----------------------------------------------------------------------------
def ref_forward(x_nchw, v, p):
    def bn_train(o, g, b):
        mean = o.mean(axis=(0, 2, 3), keepdims=True)
        var = ((o - mean) ** 2).mean(axis=(0, 2, 3), keepdims=True)
        return (o - mean) * jax.lax.rsqrt(var + 1e-5) * g[0][None, :, None, None] \
            + b[0][None, :, None, None]

    v1 = jax.nn.relu(v @ p["l1w"] + p["l1b"][0])
    v2 = v1 @ p["l2w"] + p["l2b"][0]
    h = x_nchw + v2[:, :, None, None]

    def conv_bn_relu(h, w_hwio, cb, g, b):
        o = jax.lax.conv_general_dilated(
            h, w_hwio, (1, 1), "SAME",
            dimension_numbers=("NCHW", "HWIO", "NCHW"))
        o = o + cb[0][None, :, None, None]
        return jax.nn.relu(bn_train(o, g, b))

    h1 = conv_bn_relu(h, p["c1w_hwio"], p["c1b"], p["g1"], p["b1"])
    return conv_bn_relu(h1, p["c2w_hwio"], p["c2b"], p["g2"], p["b2"])


if __name__ == "__main__":
    N, Cin, Cout, H, W, P = 2, 4, 8, 16, 16, 32

    key = jax.random.PRNGKey(0)
    ks = jax.random.split(key, 12)

    # deterministic synthetic parameters (Linear stored as (in,out), Conv as HWIO)
    params = {
        "l1w": jax.random.normal(ks[0], (P, Cin), jnp.float32) * 0.2,
        "l1b": jax.random.normal(ks[1], (1, Cin), jnp.float32) * 0.1,
        "l2w": jax.random.normal(ks[2], (Cin, Cin), jnp.float32) * 0.3,
        "l2b": jax.random.normal(ks[3], (1, Cin), jnp.float32) * 0.1,
        "c1w_hwio": jax.random.normal(ks[4], (3, 3, Cin, Cout), jnp.float32) * 0.3,
        "c1b": jax.random.normal(ks[5], (1, Cout), jnp.float32) * 0.1,
        "g1": 1.0 + 0.1 * jax.random.normal(ks[6], (1, Cout), jnp.float32),
        "b1": 0.1 * jax.random.normal(ks[7], (1, Cout), jnp.float32),
        "c2w_hwio": jax.random.normal(ks[8], (3, 3, Cout, Cout), jnp.float32) * 0.2,
        "c2b": jax.random.normal(ks[9], (1, Cout), jnp.float32) * 0.1,
        "g2": 1.0 + 0.1 * jax.random.normal(ks[10], (1, Cout), jnp.float32),
        "b2": 0.1 * jax.random.normal(ks[11], (1, Cout), jnp.float32),
    }

    # inputs (PyTorch convention: x is NCHW, v is (N, pos_encoding_dim))
    kx, kv = jax.random.split(jax.random.PRNGKey(1))
    x_nchw = jax.random.normal(kx, (N, Cin, H, W), jnp.float32)
    v = jax.random.normal(kv, (N, P), jnp.float32)

    y_ref = ref_forward(x_nchw, v, params)

    # default / fast path: bf16 MXU operands (native on v5e/v6e/v7x); f32
    # accumulation + f32 BN/ReLU.  f32-operand path kept for exactness check.
    # (bf16 operand rounding over K=192/384 contractions -> looser tolerance;
    # observed max-abs err ~< 0.15 at these shapes.)
    checks = ((jnp.bfloat16, 2e-1), (jnp.float32, 2e-3))
    y_out = None
    for mxu_dtype, tol in checks:
        folded = fold_convblock_params(params, W, mxu_dtype=mxu_dtype)  # one-time setup
        y = convblock_forward(x_nchw, v, folded)
        jax.block_until_ready(y)
        assert y.shape == (N, Cout, H, W)
        err = float(jnp.max(jnp.abs(y - y_ref)))
        assert err < tol, f"mismatch vs reference ({mxu_dtype.__name__}): {err}"
        if y_out is None:
            y_out = y

    print("KERNEL_OK")
</pallas_src>

<mosaic_0001>
module attributes {stable_mosaic.version = 11 : i64} {
  func.func @convblock_kernel(%arg0: memref<2x16x64xf32, #tpu.memory_space<vmem>>, %arg1: memref<2x32xf32, #tpu.memory_space<vmem>>, %arg2: memref<32x4xbf16, #tpu.memory_space<vmem>>, %arg3: memref<1x4xf32, #tpu.memory_space<vmem>>, %arg4: memref<4x4xbf16, #tpu.memory_space<vmem>>, %arg5: memref<1x4xf32, #tpu.memory_space<vmem>>, %arg6: memref<4x64xf32, #tpu.memory_space<vmem>>, %arg7: memref<192x128xbf16, #tpu.memory_space<vmem>>, %arg8: memref<1x8xf32, #tpu.memory_space<vmem>>, %arg9: memref<1x8xf32, #tpu.memory_space<vmem>>, %arg10: memref<384x128xbf16, #tpu.memory_space<vmem>>, %arg11: memref<1x8xf32, #tpu.memory_space<vmem>>, %arg12: memref<1x8xf32, #tpu.memory_space<vmem>>, %arg13: memref<128x8xf32, #tpu.memory_space<vmem>>, %arg14: memref<8x128xf32, #tpu.memory_space<vmem>>, %arg15: memref<2x16x128xf32, #tpu.memory_space<vmem>>) attributes {dimension_semantics = [], scalar_prefetch = 0 : i64, scratch_operands = 0 : i64, tpu.core_type = #tpu.core_type<tc>} {
    %c0 = arith.constant 0 : index
    %c0_0 = arith.constant 0 : index
    %0 = vector.load %arg1[%c0, %c0_0] : memref<2x32xf32, #tpu.memory_space<vmem>>, vector<2x32xf32>
    %1 = arith.truncf %0 : vector<2x32xf32> to vector<2x32xbf16>
    %c0_1 = arith.constant 0 : index
    %c0_2 = arith.constant 0 : index
    %2 = vector.load %arg2[%c0_1, %c0_2] : memref<32x4xbf16, #tpu.memory_space<vmem>>, vector<32x4xbf16>
    %cst = arith.constant dense<0.000000e+00> : vector<2x4xf32>
    %3 = tpu.matmul %1, %2, %cst {dimension_numbers = #tpu.dot_dimension_numbers<[1], [0], [0], [1], [0, 0, 1, 1], [], []>} : vector<2x32xbf16>, vector<32x4xbf16>, vector<2x4xf32> -> vector<2x4xf32>
    %c0_3 = arith.constant 0 : index
    %c0_4 = arith.constant 0 : index
    %4 = vector.load %arg3[%c0_3, %c0_4] : memref<1x4xf32, #tpu.memory_space<vmem>>, vector<1x4xf32>
    %5 = vector.broadcast %4 : vector<1x4xf32> to vector<2x4xf32>
    %6 = arith.addf %3, %5 : vector<2x4xf32>
    %cst_5 = arith.constant 0.000000e+00 : f32
    %7 = vector.broadcast %cst_5 : f32 to vector<2x4xf32>
    %8 = arith.maximumf %6, %7 : vector<2x4xf32>
    %9 = arith.truncf %8 : vector<2x4xf32> to vector<2x4xbf16>
    %c0_6 = arith.constant 0 : index
    %c0_7 = arith.constant 0 : index
    %10 = vector.load %arg4[%c0_6, %c0_7] : memref<4x4xbf16, #tpu.memory_space<vmem>>, vector<4x4xbf16>
    %cst_8 = arith.constant dense<0.000000e+00> : vector<2x4xf32>
    %11 = tpu.matmul %9, %10, %cst_8 {dimension_numbers = #tpu.dot_dimension_numbers<[1], [0], [0], [1], [0, 0, 1, 1], [], []>} : vector<2x4xbf16>, vector<4x4xbf16>, vector<2x4xf32> -> vector<2x4xf32>
    %c0_9 = arith.constant 0 : index
    %c0_10 = arith.constant 0 : index
    %12 = vector.load %arg5[%c0_9, %c0_10] : memref<1x4xf32, #tpu.memory_space<vmem>>, vector<1x4xf32>
    %13 = vector.broadcast %12 : vector<1x4xf32> to vector<2x4xf32>
    %14 = arith.addf %11, %13 : vector<2x4xf32>
    %c0_11 = arith.constant 0 : index
    %c0_12 = arith.constant 0 : index
    %15 = vector.load %arg6[%c0_11, %c0_12] : memref<4x64xf32, #tpu.memory_space<vmem>>, vector<4x64xf32>
    %cst_13 = arith.constant dense<0.000000e+00> : vector<2x64xf32>
    %16 = tpu.matmul %14, %15, %cst_13 {dimension_numbers = #tpu.dot_dimension_numbers<[1], [0], [0], [1], [0, 0, 1, 1], [], []>} : vector<2x4xf32>, vector<4x64xf32>, vector<2x64xf32> -> vector<2x64xf32>
    %c0_14 = arith.constant 0 : index
    %c0_15 = arith.constant 0 : index
    %c0_16 = arith.constant 0 : index
    %17 = vector.load %arg0[%c0_14, %c0_15, %c0_16] : memref<2x16x64xf32, #tpu.memory_space<vmem>>, vector<2x16x64xf32>
    %18 = vector.shape_cast %16 : vector<2x64xf32> to vector<2x1x64xf32>
    %19 = vector.broadcast %18 : vector<2x1x64xf32> to vector<2x16x64xf32>
    %20 = arith.addf %17, %19 : vector<2x16x64xf32>
    %c0_17 = arith.constant 0 : index
    %c0_18 = arith.constant 0 : index
    %21 = vector.load %arg13[%c0_17, %c0_18] : memref<128x8xf32, #tpu.memory_space<vmem>>, vector<128x8xf32>
    %c0_19 = arith.constant 0 : index
    %c0_20 = arith.constant 0 : index
    %22 = vector.load %arg14[%c0_19, %c0_20] : memref<8x128xf32, #tpu.memory_space<vmem>>, vector<8x128xf32>
    %23 = arith.truncf %20 : vector<2x16x64xf32> to vector<2x16x64xbf16>
    %cst_21 = arith.constant 0.000000e+00 : bf16
    %24 = vector.broadcast %cst_21 : bf16 to vector<2x1x64xbf16>
    %25 = vector.extract_strided_slice %23 {offsets = [0, 0, 0], sizes = [2, 15, 64], strides = [1, 1, 1]} : vector<2x16x64xbf16> to vector<2x15x64xbf16>
    %26 = tpu.concatenate %24, %25 in 1 : vector<2x1x64xbf16>, vector<2x15x64xbf16> -> vector<2x16x64xbf16>
    %27 = vector.extract_strided_slice %23 {offsets = [0, 1, 0], sizes = [2, 15, 64], strides = [1, 1, 1]} : vector<2x16x64xbf16> to vector<2x15x64xbf16>
    %28 = tpu.concatenate %27, %24 in 1 : vector<2x15x64xbf16>, vector<2x1x64xbf16> -> vector<2x16x64xbf16>
    %29 = tpu.concatenate %26, %23, %28 in 2 : vector<2x16x64xbf16>, vector<2x16x64xbf16>, vector<2x16x64xbf16> -> vector<2x16x192xbf16>
    %30 = vector.shape_cast %29 : vector<2x16x192xbf16> to vector<32x192xbf16>
    %c0_22 = arith.constant 0 : index
    %c0_23 = arith.constant 0 : index
    %31 = vector.load %arg7[%c0_22, %c0_23] : memref<192x128xbf16, #tpu.memory_space<vmem>>, vector<192x128xbf16>
    %cst_24 = arith.constant dense<0.000000e+00> : vector<32x128xf32>
    %32 = tpu.matmul %30, %31, %cst_24 {dimension_numbers = #tpu.dot_dimension_numbers<[1], [0], [0], [1], [0, 0, 1, 1], [], []>} : vector<32x192xbf16>, vector<192x128xbf16>, vector<32x128xf32> -> vector<32x128xf32>
    %cst_25 = arith.constant dense<0.000000e+00> : vector<128xf32>
    %33 = vector.multi_reduction <add>, %32, %cst_25 [0] : vector<32x128xf32> to vector<128xf32>
    %34 = vector.shape_cast %33 : vector<128xf32> to vector<1x128xf32>
    %35 = arith.mulf %32, %32 : vector<32x128xf32>
    %cst_26 = arith.constant dense<0.000000e+00> : vector<128xf32>
    %36 = vector.multi_reduction <add>, %35, %cst_26 [0] : vector<32x128xf32> to vector<128xf32>
    %37 = vector.shape_cast %36 : vector<128xf32> to vector<1x128xf32>
    %38 = tpu.concatenate %34, %37 in 0 : vector<1x128xf32>, vector<1x128xf32> -> vector<2x128xf32>
    %cst_27 = arith.constant dense<0.000000e+00> : vector<2x8xf32>
    %39 = tpu.matmul %38, %21, %cst_27 {dimension_numbers = #tpu.dot_dimension_numbers<[1], [0], [0], [1], [0, 0, 1, 1], [], []>} : vector<2x128xf32>, vector<128x8xf32>, vector<2x8xf32> -> vector<2x8xf32>
    %cst_28 = arith.constant 0.001953125 : f32
    %40 = vector.broadcast %cst_28 : f32 to vector<2x8xf32>
    %41 = arith.mulf %39, %40 : vector<2x8xf32>
    %42 = vector.extract_strided_slice %41 {offsets = [0, 0], sizes = [1, 8], strides = [1, 1]} : vector<2x8xf32> to vector<1x8xf32>
    %43 = vector.extract_strided_slice %41 {offsets = [1, 0], sizes = [1, 8], strides = [1, 1]} : vector<2x8xf32> to vector<1x8xf32>
    %44 = arith.mulf %42, %42 : vector<1x8xf32>
    %45 = arith.subf %43, %44 : vector<1x8xf32>
    %cst_29 = arith.constant 0.000000e+00 : f32
    %46 = vector.broadcast %cst_29 : f32 to vector<1x8xf32>
    %47 = arith.maximumf %45, %46 : vector<1x8xf32>
    %c0_30 = arith.constant 0 : index
    %c0_31 = arith.constant 0 : index
    %48 = vector.load %arg8[%c0_30, %c0_31] : memref<1x8xf32, #tpu.memory_space<vmem>>, vector<1x8xf32>
    %cst_32 = arith.constant 9.99999974E-6 : f32
    %49 = vector.broadcast %cst_32 : f32 to vector<1x8xf32>
    %50 = arith.addf %47, %49 : vector<1x8xf32>
    %51 = math.rsqrt %50 : vector<1x8xf32>
    %52 = arith.mulf %48, %51 : vector<1x8xf32>
    %c0_33 = arith.constant 0 : index
    %c0_34 = arith.constant 0 : index
    %53 = vector.load %arg9[%c0_33, %c0_34] : memref<1x8xf32, #tpu.memory_space<vmem>>, vector<1x8xf32>
    %54 = arith.mulf %42, %52 : vector<1x8xf32>
    %55 = arith.subf %53, %54 : vector<1x8xf32>
    %56 = tpu.concatenate %52, %55 in 0 : vector<1x8xf32>, vector<1x8xf32> -> vector<2x8xf32>
    %cst_35 = arith.constant dense<0.000000e+00> : vector<2x128xf32>
    %57 = tpu.matmul %56, %22, %cst_35 {dimension_numbers = #tpu.dot_dimension_numbers<[1], [0], [0], [1], [0, 0, 1, 1], [], []>} : vector<2x8xf32>, vector<8x128xf32>, vector<2x128xf32> -> vector<2x128xf32>
    %58 = vector.extract_strided_slice %57 {offsets = [0, 0], sizes = [1, 128], strides = [1, 1]} : vector<2x128xf32> to vector<1x128xf32>
    %59 = vector.broadcast %58 : vector<1x128xf32> to vector<32x128xf32>
    %60 = arith.mulf %32, %59 : vector<32x128xf32>
    %61 = vector.extract_strided_slice %57 {offsets = [1, 0], sizes = [1, 128], strides = [1, 1]} : vector<2x128xf32> to vector<1x128xf32>
    %62 = vector.broadcast %61 : vector<1x128xf32> to vector<32x128xf32>
    %63 = arith.addf %60, %62 : vector<32x128xf32>
    %cst_36 = arith.constant 0.000000e+00 : f32
    %64 = vector.broadcast %cst_36 : f32 to vector<32x128xf32>
    %65 = arith.maximumf %63, %64 : vector<32x128xf32>
    %66 = vector.shape_cast %65 : vector<32x128xf32> to vector<2x16x128xf32>
    %67 = arith.truncf %66 : vector<2x16x128xf32> to vector<2x16x128xbf16>
    %cst_37 = arith.constant 0.000000e+00 : bf16
    %68 = vector.broadcast %cst_37 : bf16 to vector<2x1x128xbf16>
    %69 = vector.extract_strided_slice %67 {offsets = [0, 0, 0], sizes = [2, 15, 128], strides = [1, 1, 1]} : vector<2x16x128xbf16> to vector<2x15x128xbf16>
    %70 = tpu.concatenate %68, %69 in 1 : vector<2x1x128xbf16>, vector<2x15x128xbf16> -> vector<2x16x128xbf16>
    %71 = vector.extract_strided_slice %67 {offsets = [0, 1, 0], sizes = [2, 15, 128], strides = [1, 1, 1]} : vector<2x16x128xbf16> to vector<2x15x128xbf16>
    %72 = tpu.concatenate %71, %68 in 1 : vector<2x15x128xbf16>, vector<2x1x128xbf16> -> vector<2x16x128xbf16>
    %73 = tpu.concatenate %70, %67, %72 in 2 : vector<2x16x128xbf16>, vector<2x16x128xbf16>, vector<2x16x128xbf16> -> vector<2x16x384xbf16>
    %74 = vector.shape_cast %73 : vector<2x16x384xbf16> to vector<32x384xbf16>
    %c0_38 = arith.constant 0 : index
    %c0_39 = arith.constant 0 : index
    %75 = vector.load %arg10[%c0_38, %c0_39] : memref<384x128xbf16, #tpu.memory_space<vmem>>, vector<384x128xbf16>
    %cst_40 = arith.constant dense<0.000000e+00> : vector<32x128xf32>
    %76 = tpu.matmul %74, %75, %cst_40 {dimension_numbers = #tpu.dot_dimension_numbers<[1], [0], [0], [1], [0, 0, 1, 1], [], []>} : vector<32x384xbf16>, vector<384x128xbf16>, vector<32x128xf32> -> vector<32x128xf32>
    %cst_41 = arith.constant dense<0.000000e+00> : vector<128xf32>
    %77 = vector.multi_reduction <add>, %76, %cst_41 [0] : vector<32x128xf32> to vector<128xf32>
    %78 = vector.shape_cast %77 : vector<128xf32> to vector<1x128xf32>
    %79 = arith.mulf %76, %76 : vector<32x128xf32>
    %cst_42 = arith.constant dense<0.000000e+00> : vector<128xf32>
    %80 = vector.multi_reduction <add>, %79, %cst_42 [0] : vector<32x128xf32> to vector<128xf32>
    %81 = vector.shape_cast %80 : vector<128xf32> to vector<1x128xf32>
    %82 = tpu.concatenate %78, %81 in 0 : vector<1x128xf32>, vector<1x128xf32> -> vector<2x128xf32>
    %cst_43 = arith.constant dense<0.000000e+00> : vector<2x8xf32>
    %83 = tpu.matmul %82, %21, %cst_43 {dimension_numbers = #tpu.dot_dimension_numbers<[1], [0], [0], [1], [0, 0, 1, 1], [], []>} : vector<2x128xf32>, vector<128x8xf32>, vector<2x8xf32> -> vector<2x8xf32>
    %cst_44 = arith.constant 0.001953125 : f32
    %84 = vector.broadcast %cst_44 : f32 to vector<2x8xf32>
    %85 = arith.mulf %83, %84 : vector<2x8xf32>
    %86 = vector.extract_strided_slice %85 {offsets = [0, 0], sizes = [1, 8], strides = [1, 1]} : vector<2x8xf32> to vector<1x8xf32>
    %87 = vector.extract_strided_slice %85 {offsets = [1, 0], sizes = [1, 8], strides = [1, 1]} : vector<2x8xf32> to vector<1x8xf32>
    %88 = arith.mulf %86, %86 : vector<1x8xf32>
    %89 = arith.subf %87, %88 : vector<1x8xf32>
    %cst_45 = arith.constant 0.000000e+00 : f32
    %90 = vector.broadcast %cst_45 : f32 to vector<1x8xf32>
    %91 = arith.maximumf %89, %90 : vector<1x8xf32>
    %c0_46 = arith.constant 0 : index
    %c0_47 = arith.constant 0 : index
    %92 = vector.load %arg11[%c0_46, %c0_47] : memref<1x8xf32, #tpu.memory_space<vmem>>, vector<1x8xf32>
    %cst_48 = arith.constant 9.99999974E-6 : f32
    %93 = vector.broadcast %cst_48 : f32 to vector<1x8xf32>
    %94 = arith.addf %91, %93 : vector<1x8xf32>
    %95 = math.rsqrt %94 : vector<1x8xf32>
    %96 = arith.mulf %92, %95 : vector<1x8xf32>
    %c0_49 = arith.constant 0 : index
    %c0_50 = arith.constant 0 : index
    %97 = vector.load %arg12[%c0_49, %c0_50] : memref<1x8xf32, #tpu.memory_space<vmem>>, vector<1x8xf32>
    %98 = arith.mulf %86, %96 : vector<1x8xf32>
    %99 = arith.subf %97, %98 : vector<1x8xf32>
    %100 = tpu.concatenate %96, %99 in 0 : vector<1x8xf32>, vector<1x8xf32> -> vector<2x8xf32>
    %cst_51 = arith.constant dense<0.000000e+00> : vector<2x128xf32>
    %101 = tpu.matmul %100, %22, %cst_51 {dimension_numbers = #tpu.dot_dimension_numbers<[1], [0], [0], [1], [0, 0, 1, 1], [], []>} : vector<2x8xf32>, vector<8x128xf32>, vector<2x128xf32> -> vector<2x128xf32>
    %102 = vector.extract_strided_slice %101 {offsets = [0, 0], sizes = [1, 128], strides = [1, 1]} : vector<2x128xf32> to vector<1x128xf32>
    %103 = vector.broadcast %102 : vector<1x128xf32> to vector<32x128xf32>
    %104 = arith.mulf %76, %103 : vector<32x128xf32>
    %105 = vector.extract_strided_slice %101 {offsets = [1, 0], sizes = [1, 128], strides = [1, 1]} : vector<2x128xf32> to vector<1x128xf32>
    %106 = vector.broadcast %105 : vector<1x128xf32> to vector<32x128xf32>
    %107 = arith.addf %104, %106 : vector<32x128xf32>
    %cst_52 = arith.constant 0.000000e+00 : f32
    %108 = vector.broadcast %cst_52 : f32 to vector<32x128xf32>
    %109 = arith.maximumf %107, %108 : vector<32x128xf32>
    %110 = vector.shape_cast %109 : vector<32x128xf32> to vector<2x16x128xf32>
    %c0_53 = arith.constant 0 : index
    %c0_54 = arith.constant 0 : index
    %c0_55 = arith.constant 0 : index
    %111 = vector.load %arg15[%c0_53, %c0_54, %c0_55] : memref<2x16x128xf32, #tpu.memory_space<vmem>>, vector<2x16x128xf32>
    tpu.vector_store %arg15[%c0_53, %c0_54, %c0_55], %110 {strides = array<i32>} : memref<2x16x128xf32, #tpu.memory_space<vmem>>, vector<2x16x128xf32>,
    return
  }
}

</mosaic_0001>

<llo_original>
// kernel: tpu_custom_call.1
$region0: #{tpu_custom_call.1}
  #allocation0 [shape = 'u32[]', space=smem, size = 0x4, offset = 0x4, fixed_abs, tag = 'smem constant byte address 0x4 - core index']
  #allocation1 [shape = 'u32[144,128]{1,0:T(1,128)}', space=vmem, size = 0x12000, scoped, tag = 'internal scratch']
  %s0 = inlined_call_operand.vmem [shape: f32[2,16,64], index: 0, kind: input, shape index: {}]
  %s1 = inlined_call_operand.vmem [shape: f32[2,32], index: 1, kind: input, shape index: {}]
  %s2 = inlined_call_operand.vmem [shape: bf16[32,4], index: 2, kind: input, shape index: {}]
  %s3 = inlined_call_operand.vmem [shape: f32[1,4], index: 3, kind: input, shape index: {}]
  %s4 = inlined_call_operand.vmem [shape: bf16[4,4], index: 4, kind: input, shape index: {}]
  %s5 = inlined_call_operand.vmem [shape: f32[1,4], index: 5, kind: input, shape index: {}]
  %s6 = inlined_call_operand.vmem [shape: f32[4,64], index: 6, kind: input, shape index: {}]
  %s7 = inlined_call_operand.vmem [shape: bf16[192,128], index: 7, kind: input, shape index: {}]
  %s8 = inlined_call_operand.vmem [shape: f32[1,8], index: 8, kind: input, shape index: {}]
  %s9 = inlined_call_operand.vmem [shape: f32[1,8], index: 9, kind: input, shape index: {}]
  %s10 = inlined_call_operand.hbm [shape: bf16[384,128], index: 10, kind: input, shape index: {}]
  %s11 = inlined_call_operand.vmem [shape: f32[1,8], index: 11, kind: input, shape index: {}]
  %s12 = inlined_call_operand.vmem [shape: f32[1,8], index: 12, kind: input, shape index: {}]
  %s13 = inlined_call_operand.vmem [shape: f32[128,8], index: 13, kind: input, shape index: {}]
  %s14 = inlined_call_operand.vmem [shape: f32[8,128], index: 14, kind: input, shape index: {}]
  %s15 = inlined_call_operand.hbm [shape: f32[2,16,128], index: 15, kind: output, shape index: {}]
  %s16 = sld [smem:[#allocation0]]
  $region74: #{tpu_custom_call.1} parent=0
    _
  %s18 = ssub.s32 1, %s16
  %s19 = scalar_select 0, %s18, %s16
  $region1: #{tpu_custom_call.1} parent=0
    #allocation2 [shape = 'u8[98304]{0}', space=vmem, size = 0x18000, scoped, tag = 'input window, operand 10, single buffered']
    #allocation3 [shape = 's32[1]{0}', space=sflag, size = 0x4, scoped, tag = 'scoped memory for tpu_custom_call.1']
    #allocation4 [shape = 's32[1]{0}', space=sflag, size = 0x4, scoped, tag = 'scoped memory for tpu_custom_call.1']
    #allocation5 [shape = 'u8[16384]{0}', space=vmem, size = 0x4000, scoped, tag = 'output window, operand 0, single buffered']
    %20 = vsyncpa [#allocation3], 0
    %21 = vsyncpa [#allocation4], 0
    // Predicated region
    $region2: #{tpu_custom_call.1} parent=1 // pred_check
      _
    $region3: #{tpu_custom_call.1} parent=1 // pred_check_branch
      %23 = sbr.rel (0) target = $region5
    $region4: #{tpu_custom_call.1} parent=1 // pred_region
      _
    $region5: #{tpu_custom_call.1} parent=1 // pred_fallthru
      _
    // Predicated region
    $region6: #{tpu_custom_call.1} parent=1 // pred_check
      _
    $region7: #{tpu_custom_call.1} parent=1 // pred_check_branch
      %25 = sbr.rel (0) target = $region9
    $region8: #{tpu_custom_call.1} parent=1 // pred_region
      _
    $region9: #{tpu_custom_call.1} parent=1 // pred_fallthru
      _
    // Predicated region
    $region10: #{tpu_custom_call.1} parent=1 // pred_check
      _
    $region11: #{tpu_custom_call.1} parent=1 // pred_check_branch
      %27 = sbr.rel (0) target = $region13
    $region12: #{tpu_custom_call.1} parent=1 // pred_region
      _
    $region13: #{tpu_custom_call.1} parent=1 // pred_fallthru
      _
    // Predicated region
    $region14: #{tpu_custom_call.1} parent=1 // pred_check
      _
    $region15: #{tpu_custom_call.1} parent=1 // pred_check_branch
      %29 = sbr.rel (0) target = $region17
    $region16: #{tpu_custom_call.1} parent=1 // pred_region
      _
    $region17: #{tpu_custom_call.1} parent=1 // pred_fallthru
      _
    // Predicated region
    $region18: #{tpu_custom_call.1} parent=1 // pred_check
      _
    $region19: #{tpu_custom_call.1} parent=1 // pred_check_branch
      %31 = sbr.rel (0) target = $region21
    $region20: #{tpu_custom_call.1} parent=1 // pred_region
      _
    $region21: #{tpu_custom_call.1} parent=1 // pred_fallthru
      _
    // Predicated region
    $region22: #{tpu_custom_call.1} parent=1 // pred_check
      _
    $region23: #{tpu_custom_call.1} parent=1 // pred_check_branch
      %33 = sbr.rel (0) target = $region25
    $region24: #{tpu_custom_call.1} parent=1 // pred_region
      _
    $region25: #{tpu_custom_call.1} parent=1 // pred_fallthru
      _
    // Predicated region
    $region26: #{tpu_custom_call.1} parent=1 // pred_check
      _
    $region27: #{tpu_custom_call.1} parent=1 // pred_check_branch
      %35 = sbr.rel (0) target = $region29
    $region28: #{tpu_custom_call.1} parent=1 // pred_region
      _
    $region29: #{tpu_custom_call.1} parent=1 // pred_fallthru
      _
    // Predicated region
    $region30: #{tpu_custom_call.1} parent=1 // pred_check
      _
    $region31: #{tpu_custom_call.1} parent=1 // pred_check_branch
      %37 = sbr.rel (0) target = $region33
    $region32: #{tpu_custom_call.1} parent=1 // pred_region
      _
    $region33: #{tpu_custom_call.1} parent=1 // pred_fallthru
      _
    // Predicated region
    $region34: #{tpu_custom_call.1} parent=1 // pred_check
      _
    $region35: #{tpu_custom_call.1} parent=1 // pred_check_branch
      %39 = sbr.rel (0) target = $region37
    $region36: #{tpu_custom_call.1} parent=1 // pred_region
      _
    $region37: #{tpu_custom_call.1} parent=1 // pred_fallthru
      _
    // Predicated region
    $region38: #{tpu_custom_call.1} parent=1 // pred_check
      _
    $region39: #{tpu_custom_call.1} parent=1 // pred_check_branch
      %41 = sbr.rel (0) target = $region41
    $region40: #{tpu_custom_call.1} parent=1 // pred_region
      _
    $region41: #{tpu_custom_call.1} parent=1 // pred_fallthru
      _
    // Predicated region
    $region42: #{tpu_custom_call.1} parent=1 // pred_check
      _
    $region43: #{tpu_custom_call.1} parent=1 // pred_check_branch
      %43 = sbr.rel (0) target = $region45
    $region44: #{tpu_custom_call.1} parent=1 // pred_region
      %s45 = ssub.s32 3072, 3072
      %46 = vsyncadd [#allocation3], %s45
      %s47 = sshll.u32 [#allocation2], 4
      %s48 = int_to_ptr.vmem [resolvable:$true] %s47
      %53 = dma.hbm_to_vmem [thread:$0]  %s10, 3072, %s48, [#allocation3], 64, 64, 4
    $region45: #{tpu_custom_call.1} parent=1 // pred_fallthru
      _
    // Predicated region
    $region46: #{tpu_custom_call.1} parent=1 // pred_check
      _
    $region47: #{tpu_custom_call.1} parent=1 // pred_check_branch
      %55 = sbr.rel (0) target = $region49
    $region48: #{tpu_custom_call.1} parent=1 // pred_region
      _
    $region49: #{tpu_custom_call.1} parent=1 // pred_fallthru
      _
    // Predicated region
    $region50: #{tpu_custom_call.1} parent=1 // pred_check
      _
    $region51: #{tpu_custom_call.1} parent=1 // pred_check_branch
      %57 = sbr.rel (0) target = $region53
    $region52: #{tpu_custom_call.1} parent=1 // pred_region
      _
    $region53: #{tpu_custom_call.1} parent=1 // pred_fallthru
      _
    // Predicated region
    $region54: #{tpu_custom_call.1} parent=1 // pred_check
      _
    $region55: #{tpu_custom_call.1} parent=1 // pred_check_branch
      %59 = sbr.rel (0) target = $region57
    $region56: #{tpu_custom_call.1} parent=1 // pred_region
      _
    $region57: #{tpu_custom_call.1} parent=1 // pred_fallthru
      _
    // Predicated region
    $region58: #{tpu_custom_call.1} parent=1 // pred_check
      _
    $region59: #{tpu_custom_call.1} parent=1 // pred_check_branch
      %61 = sbr.rel (0) target = $region61
    $region60: #{tpu_custom_call.1} parent=1 // pred_region
      _
    $region61: #{tpu_custom_call.1} parent=1 // pred_fallthru
      _
    // Predicated region
    $region62: #{tpu_custom_call.1} parent=1 // pred_check
      _
    $region63: #{tpu_custom_call.1} parent=1 // pred_check_branch
      %63 = sbr.rel (0) target = $region65
    $region64: #{tpu_custom_call.1} parent=1 // pred_region
      %64 = dma.done [#allocation3], 3072
    $region65: #{tpu_custom_call.1} parent=1 // pred_fallthru
      _
    %v66 = vld [vmem:[%s1] sm:$0x3]
    %v67 = vpack.c.bf16 %v66, %v66
    %v68 = vld [vmem:[%s2] sm:$0xf]
    %v69 = vld [vmem:[%s2 + $0x4] sm:$0xf]
    %v70 = vld [vmem:[%s2 + $0x8] sm:$0xf]
    %v71 = vld [vmem:[%s2 + $0xc] sm:$0xf]
    %v72 = vld [vmem:[%s3] sm:$0x1]
    %v74 = vlaneseq
    %v75 = vshrl.u32 %v74, 7
    %v76 = vsub.s32 0, %v75
    %v77 = vrot.slane %v72, %v76
    %v83 = vunpack.c.l.b16 %v68
    %v84 = vunpack.c.l.b16 %v69
    %v85 = vunpack.c.l.b16 %v70
    %v86 = vunpack.c.l.b16 %v71
    %v87 = vpack.c.b16 %v84, %v83
    %v88 = vpack.c.b16 %v86, %v85
    %vm91 = vcmask 261120
    %v93 = vsel %vm91, %v67, 0
    %95 = vmatprep.subr.bf16.mxu0 0
    %96 = vmatpush1.bf16.msra.mxu0 %v87
    %97 = vmatprep.subr.bf16.mxu0 0
    %98 = vmatpush1.bf16.msra.mxu0 %v88
    %99 = vmatprep.subr.bf16.mxu0 0
    %100 = vmatpush1.bf16.msra.mxu0 0
    %101 = vmatprep.subr.bf16.mxu0 0
    %102 = vmatpush1.bf16.msra.mxu0 0
    %103 = vmatprep.subr.bf16.mxu0 0
    %104 = vmatpush1.bf16.msra.mxu0 0
    %105 = vmatprep.subr.bf16.mxu0 0
    %106 = vmatpush1.bf16.msra.mxu0 0
    %107 = vmatprep.subr.bf16.mxu0 0
    %108 = vmatpush1.bf16.msra.mxu0 0
    %109 = vmatprep.subr.bf16.mxu0 0
    %110 = vmatpush1.bf16.msra.mxu0 0
    %111 = vmatprep.subr.bf16.mxu0 0
    %112 = vmatpush1.bf16.msra.mxu0 0
    %113 = vmatprep.subr.bf16.mxu0 0
    %114 = vmatpush1.bf16.msra.mxu0 0
    %115 = vmatprep.subr.bf16.mxu0 0
    %116 = vmatpush1.bf16.msra.mxu0 0
    %117 = vmatprep.subr.bf16.mxu0 0
    %118 = vmatpush1.bf16.msra.mxu0 0
    %119 = vmatprep.subr.bf16.mxu0 0
    %120 = vmatpush1.bf16.msra.mxu0 0
    %121 = vmatprep.subr.bf16.mxu0 0
    %122 = vmatpush1.bf16.msra.mxu0 0
    %123 = vmatprep.subr.bf16.mxu0 0
    %124 = vmatpush1.bf16.msra.mxu0 0
    %125 = vmatprep.subr.bf16.mxu0 0
    %126 = vmatpush1.bf16.msra.mxu0 0
    %127 = vmatprep.mubr.bf16.mxu0 0
    %128 = vmatmul.mubr.bf16.gmra.mrb[0].mxu0 %v93
    %v129 = vpop.f32.mrb[0].mxu0
    %v130 = vadd.f32 %v77, %v129
    %v131 = vpop.f32.mrb[0].mxu0
    %v132 = vpop.f32.mrb[0].mxu0
    %v133 = vpop.f32.mrb[0].mxu0
    %134 = vdwg.mxu0
    %v135 = vmax.f32 %v130, 0.0
    %v136 = vpack.c.bf16 %v135, %v135
    %v137 = vld [vmem:[%s4] sm:$0x3]
    %v138 = vld [vmem:[%s5] sm:$0x1]
    %v140 = vlaneseq
    %v141 = vshrl.u32 %v140, 7
    %v142 = vsub.s32 0, %v141
    %v143 = vrot.slane %v138, %v142
    %vm145 = vcmask 31744
    %v147 = vsel %vm145, %v136, 0
    %vm149 = vcmask 1041408
    %v151 = vsel %vm149, %v137, 0
    %153 = vmatprep.subr.bf16.mxu0 0
    %154 = vmatpush1.bf16.msra.mxu0 %v151
    %155 = vmatprep.subr.bf16.mxu0 0
    %156 = vmatpush1.bf16.msra.mxu0 0
    %157 = vmatprep.subr.bf16.mxu0 0
    %158 = vmatpush1.bf16.msra.mxu0 0
    %159 = vmatprep.subr.bf16.mxu0 0
    %160 = vmatpush1.bf16.msra.mxu0 0
    %161 = vmatprep.subr.bf16.mxu0 0
    %162 = vmatpush1.bf16.msra.mxu0 0
    %163 = vmatprep.subr.bf16.mxu0 0
    %164 = vmatpush1.bf16.msra.mxu0 0
    %165 = vmatprep.subr.bf16.mxu0 0
    %166 = vmatpush1.bf16.msra.mxu0 0
    %167 = vmatprep.subr.bf16.mxu0 0
    %168 = vmatpush1.bf16.msra.mxu0 0
    %169 = vmatprep.subr.bf16.mxu0 0
    %170 = vmatpush1.bf16.msra.mxu0 0
    %171 = vmatprep.subr.bf16.mxu0 0
    %172 = vmatpush1.bf16.msra.mxu0 0
    %173 = vmatprep.subr.bf16.mxu0 0
    %174 = vmatpush1.bf16.msra.mxu0 0
    %175 = vmatprep.subr.bf16.mxu0 0
    %176 = vmatpush1.bf16.msra.mxu0 0
    %177 = vmatprep.subr.bf16.mxu0 0
    %178 = vmatpush1.bf16.msra.mxu0 0
    %179 = vmatprep.subr.bf16.mxu0 0
    %180 = vmatpush1.bf16.msra.mxu0 0
    %181 = vmatprep.subr.bf16.mxu0 0
    %182 = vmatpush1.bf16.msra.mxu0 0
    %183 = vmatprep.subr.bf16.mxu0 0
    %184 = vmatpush1.bf16.msra.mxu0 0
    %185 = vmatprep.mubr.bf16.mxu0 0
    %186 = vmatmul.mubr.bf16.gmra.mrb[0].mxu0 %v147
    %v187 = vpop.f32.mrb[0].mxu0
    %v188 = vadd.f32 %v143, %v187
    %v189 = vpop.f32.mrb[0].mxu0
    %v190 = vpop.f32.mrb[0].mxu0
    %v191 = vpop.f32.mrb[0].mxu0
    %192 = vdwg.mxu0
    %v193 = vld [vmem:[%s6] sm:$0xf]
    %v195 = vsel %vm145, %v188, 0
    %vm197 = vcmask 1043456
    %v199 = vsel %vm197, %v193, 0
    %201 = vmatprep.subr.mxu0 0.0
    %202 = vmatpush1.msra.mxu0 %v199
    %203 = vmatprep.subr.mxu0 0.0
    %204 = vmatpush1.msra.mxu0 0.0
    %205 = vmatprep.subr.mxu0 0.0
    %206 = vmatpush1.msra.mxu0 0.0
    %207 = vmatprep.subr.mxu0 0.0
    %208 = vmatpush1.msra.mxu0 0.0
    %209 = vmatprep.subr.mxu0 0.0
    %210 = vmatpush1.msra.mxu0 0.0
    %211 = vmatprep.subr.mxu0 0.0
    %212 = vmatpush1.msra.mxu0 0.0
    %213 = vmatprep.subr.mxu0 0.0
    %214 = vmatpush1.msra.mxu0 0.0
    %215 = vmatprep.subr.mxu0 0.0
    %216 = vmatpush1.msra.mxu0 0.0
    %217 = vmatprep.subr.mxu0 0.0
    %218 = vmatpush1.msra.mxu0 0.0
    %219 = vmatprep.subr.mxu0 0.0
    %220 = vmatpush1.msra.mxu0 0.0
    %221 = vmatprep.subr.mxu0 0.0
    %222 = vmatpush1.msra.mxu0 0.0
    %223 = vmatprep.subr.mxu0 0.0
    %224 = vmatpush1.msra.mxu0 0.0
    %225 = vmatprep.subr.mxu0 0.0
    %226 = vmatpush1.msra.mxu0 0.0
    %227 = vmatprep.subr.mxu0 0.0
    %228 = vmatpush1.msra.mxu0 0.0
    %229 = vmatprep.subr.mxu0 0.0
    %230 = vmatpush1.msra.mxu0 0.0
    %231 = vmatprep.subr.mxu0 0.0
    %232 = vmatpush1.msra.mxu0 0.0
    %233 = vmatprep.subr.mxu0 0.0
    %234 = vmatpush1.msra.mxu0 0.0
    %235 = vmatprep.subr.mxu0 0.0
    %236 = vmatpush1.msra.mxu0 0.0
    %237 = vmatprep.subr.mxu0 0.0
    %238 = vmatpush1.msra.mxu0 0.0
    %239 = vmatprep.subr.mxu0 0.0
    %240 = vmatpush1.msra.mxu0 0.0
    %241 = vmatprep.subr.mxu0 0.0
    %242 = vmatpush1.msra.mxu0 0.0
    %243 = vmatprep.subr.mxu0 0.0
    %244 = vmatpush1.msra.mxu0 0.0
    %245 = vmatprep.subr.mxu0 0.0
    %246 = vmatpush1.msra.mxu0 0.0
    %247 = vmatprep.subr.mxu0 0.0
    %248 = vmatpush1.msra.mxu0 0.0
    %249 = vmatprep.subr.mxu0 0.0
    %250 = vmatpush1.msra.mxu0 0.0
    %251 = vmatprep.subr.mxu0 0.0
    %252 = vmatpush1.msra.mxu0 0.0
    %253 = vmatprep.subr.mxu0 0.0
    %254 = vmatpush1.msra.mxu0 0.0
    %255 = vmatprep.subr.mxu0 0.0
    %256 = vmatpush1.msra.mxu0 0.0
    %257 = vmatprep.subr.mxu0 0.0
    %258 = vmatpush1.msra.mxu0 0.0
    %259 = vmatprep.subr.mxu0 0.0
    %260 = vmatpush1.msra.mxu0 0.0
    %261 = vmatprep.subr.mxu0 0.0
    %262 = vmatpush1.msra.mxu0 0.0
    %263 = vmatprep.subr.mxu0 0.0
    %264 = vmatpush1.msra.mxu0 0.0
    %265 = vmatprep.mubr.f32.mxu0 0.0
    %266 = vmatmul.mubr.f32.gmra.mrb[0].mxu0 %v195
    %v267 = vpop.f32.mrb[0].mxu0
    %v268 = vadd.f32 0.0, %v267
    %v269 = vpop.f32.mrb[0].mxu0
    %270 = vdwg.mxu0
    %v271 = vld [vmem:[%s0] sm:$0xff]
    %v272 = vld [vmem:[%s0 + $0x8] sm:$0xff]
    %v273 = vld [vmem:[%s0 + $0x10] sm:$0xff]
    %v274 = vld [vmem:[%s0 + $0x18] sm:$0xff]
    %v277 = vunpack.c.l.s4 1966171168
    %v278 = vunpack.c.0.s8 %v277
    %v279 = vlaneseq
    %v280 = vshrl.u32 %v279, 7
    %v281 = vsub.s32 %v278, %v280
    %v282 = vrot.slane %v268, %v281
    %v283 = vcombine.high %v282, %v282
    %v285 = vunpack.c.l.s4 1966171168
    %v286 = vunpack.c.0.s8 %v285
    %v287 = vlaneseq
    %v288 = vshrl.u32 %v287, 7
    %v289 = vsub.s32 %v286, %v288
    %v290 = vrot.slane %v282, %v289
    %v292 = vunpack.c.l.s4 1966171168
    %v293 = vunpack.c.0.s8 %v292
    %v294 = vlaneseq
    %v295 = vshrl.u32 %v294, 7
    %v296 = vsub.s32 %v293, %v295
    %v297 = vrot.slane %v283, %v296
    %v298 = vlaneseq
    %v299 = vshrl.u32 %v298, 7
    %v300 = vsub.s32 0, %v299
    %v301 = vrot.slane %v290, %v300
    %v302 = vlaneseq
    %v303 = vshrl.u32 %v302, 7
    %v304 = vsub.s32 0, %v303
    %v305 = vrot.slane %v297, %v304
    %v308 = vadd.f32 %v271, %v301
    %v309 = vadd.f32 %v272, %v301
    %v310 = vadd.f32 %v273, %v305
    %v311 = vadd.f32 %v274, %v305
    %v312 = vld [vmem:[%s13] sm:$0xff]
    %v313 = vld [vmem:[%s13 + $0x8] sm:$0xff]
    %v314 = vld [vmem:[%s13 + $0x10] sm:$0xff]
    %v315 = vld [vmem:[%s13 + $0x18] sm:$0xff]
    %v316 = vld [vmem:[%s13 + $0x20] sm:$0xff]
    %v317 = vld [vmem:[%s13 + $0x28] sm:$0xff]
    %v318 = vld [vmem:[%s13 + $0x30] sm:$0xff]
    %v319 = vld [vmem:[%s13 + $0x38] sm:$0xff]
    %v320 = vld [vmem:[%s13 + $0x40] sm:$0xff]
    %v321 = vld [vmem:[%s13 + $0x48] sm:$0xff]
    %v322 = vld [vmem:[%s13 + $0x50] sm:$0xff]
    %v323 = vld [vmem:[%s13 + $0x58] sm:$0xff]
    %v324 = vld [vmem:[%s13 + $0x60] sm:$0xff]
    %v325 = vld [vmem:[%s13 + $0x68] sm:$0xff]
    %v326 = vld [vmem:[%s13 + $0x70] sm:$0xff]
    %v327 = vld [vmem:[%s13 + $0x78] sm:$0xff]
    %v328 = vld [vmem:[%s14] sm:$0xff]
    %v329 = vpack.c.bf16 %v309, %v308
    %v330 = vpack.c.bf16 %v311, %v310
    %v332 = vshrl.u32 %v329, 16
    %v334 = vrot.slane %v332, 7
    %v335 = vshll.u32 %v329, 16
    %v337 = vor.u32 %v334, %v335
    %v339 = vshrl.u32 %v330, 16
    %v341 = vrot.slane %v339, 7
    %v342 = vshll.u32 %v330, 16
    %v344 = vor.u32 %v341, %v342
    %vm347 = vcmask 1040384
    %vm348 = vsmask.f32 256
    %vm349 = vmand %vm347, %vm348
    %v350 = vsel %vm349, 0, %v337
    %v351 = vsel %vm349, 0, %v344
    %v352 = vrot.slane %v335, 1
    %v353 = vor.u32 %v332, %v352
    %v354 = vrot.slane %v342, 1
    %v355 = vor.u32 %v339, %v354
    %vm358 = vcmask 1047552
    %vm359 = vsmask.f32 7424
    %vm360 = vmand %vm358, %vm359
    %v361 = vsel %vm360, %v353, 0
    %v362 = vsel %vm360, %v355, 0
    %365 = vrot.lane.b32.xlu0 %v329, 64
    %v366 = vpop.permute.xlu0 %365
    %367 = vrot.lane.b32.xlu0 %v330, 64
    %v368 = vpop.permute.xlu0 %367
    %vm369 = vcmask 523264
    %v372 = vsel %vm369, %v350, %v366
    %v376 = vsel %vm369, %v351, %v368
    %v378 = vld [vmem:[%s7] sm:$0xf]
    %v379 = vld [vmem:[%s7 + $0x4] sm:$0xf]
    %v380 = vld [vmem:[%s7 + $0x8] sm:$0xf]
    %v381 = vld [vmem:[%s7 + $0xc] sm:$0xf]
    %v382 = vld [vmem:[%s7 + $0x10] sm:$0xf]
    %v383 = vld [vmem:[%s7 + $0x14] sm:$0xf]
    %v384 = vld [vmem:[%s7 + $0x18] sm:$0xf]
    %v385 = vld [vmem:[%s7 + $0x1c] sm:$0xf]
    %v386 = vld [vmem:[%s7 + $0x20] sm:$0xf]
    %v387 = vld [vmem:[%s7 + $0x24] sm:$0xf]
    %v388 = vld [vmem:[%s7 + $0x28] sm:$0xf]
    %v389 = vld [vmem:[%s7 + $0x2c] sm:$0xf]
    %v390 = vld [vmem:[%s7 + $0x30] sm:$0xf]
    %v391 = vld [vmem:[%s7 + $0x34] sm:$0xf]
    %v392 = vld [vmem:[%s7 + $0x38] sm:$0xf]
    %v393 = vld [vmem:[%s7 + $0x3c] sm:$0xf]
    %v394 = vld [vmem:[%s7 + $0x40] sm:$0xf]
    %v395 = vld [vmem:[%s7 + $0x44] sm:$0xf]
    %v396 = vld [vmem:[%s7 + $0x48] sm:$0xf]
    %v397 = vld [vmem:[%s7 + $0x4c] sm:$0xf]
    %v398 = vld [vmem:[%s7 + $0x50] sm:$0xf]
    %v399 = vld [vmem:[%s7 + $0x54] sm:$0xf]
    %v400 = vld [vmem:[%s7 + $0x58] sm:$0xf]
    %v401 = vld [vmem:[%s7 + $0x5c] sm:$0xf]
    %v426 = vunpack.c.l.b16 %v378
    %v427 = vunpack.c.l.b16 %v379
    %v428 = vunpack.c.l.b16 %v380
    %v429 = vunpack.c.l.b16 %v381
    %v430 = vunpack.c.l.b16 %v382
    %v431 = vunpack.c.l.b16 %v383
    %v432 = vunpack.c.l.b16 %v384
    %v433 = vunpack.c.l.b16 %v385
    %v434 = vunpack.c.l.b16 %v386
    %v435 = vunpack.c.l.b16 %v387
    %v436 = vunpack.c.l.b16 %v388
    %v437 = vunpack.c.l.b16 %v389
    %v438 = vunpack.c.l.b16 %v390
    %v439 = vunpack.c.l.b16 %v391
    %v440 = vunpack.c.l.b16 %v392
    %v441 = vunpack.c.l.b16 %v393
    %v442 = vunpack.c.l.b16 %v394
    %v443 = vunpack.c.l.b16 %v395
    %v444 = vunpack.c.l.b16 %v396
    %v445 = vunpack.c.l.b16 %v397
    %v446 = vunpack.c.l.b16 %v398
    %v447 = vunpack.c.l.b16 %v399
    %v448 = vunpack.c.l.b16 %v400
    %v449 = vunpack.c.l.b16 %v401
    %v450 = vpack.c.b16 %v427, %v426
    %v451 = vpack.c.b16 %v429, %v428
    %v452 = vpack.c.b16 %v431, %v430
    %v453 = vpack.c.b16 %v433, %v432
    %v454 = vpack.c.b16 %v435, %v434
    %v455 = vpack.c.b16 %v437, %v436
    %v456 = vpack.c.b16 %v439, %v438
    %v457 = vpack.c.b16 %v441, %v440
    %v458 = vpack.c.b16 %v443, %v442
    %v459 = vpack.c.b16 %v445, %v444
    %v460 = vpack.c.b16 %v447, %v446
    %v461 = vpack.c.b16 %v449, %v448
    %v475 = vsel %vm369, %v361, 0
    %v478 = vsel %vm369, %v362, 0
    %480 = vmatprep.subr.bf16.mxu0 0
    %481 = vmatpush1.bf16.msra.mxu0 %v450
    %482 = vmatprep.subr.bf16.mxu0 0
    %483 = vmatpush1.bf16.msra.mxu0 %v451
    %484 = vmatprep.subr.bf16.mxu0 0
    %485 = vmatpush1.bf16.msra.mxu0 %v452
    %486 = vmatprep.subr.bf16.mxu0 0
    %487 = vmatpush1.bf16.msra.mxu0 %v453
    %488 = vmatprep.subr.bf16.mxu0 0
    %489 = vmatpush1.bf16.msra.mxu0 %v454
    %490 = vmatprep.subr.bf16.mxu0 0
    %491 = vmatpush1.bf16.msra.mxu0 %v455
    %492 = vmatprep.subr.bf16.mxu0 0
    %493 = vmatpush1.bf16.msra.mxu0 %v456
    %494 = vmatprep.subr.bf16.mxu0 0
    %495 = vmatpush1.bf16.msra.mxu0 %v457
    %496 = vmatprep.subr.bf16.mxu0 0
    %497 = vmatpush1.bf16.msra.mxu0 %v458
    %498 = vmatprep.subr.bf16.mxu0 0
    %499 = vmatpush1.bf16.msra.mxu0 %v459
    %500 = vmatprep.subr.bf16.mxu0 0
    %501 = vmatpush1.bf16.msra.mxu0 %v460
    %502 = vmatprep.subr.bf16.mxu0 0
    %503 = vmatpush1.bf16.msra.mxu0 %v461
    %504 = vmatprep.subr.bf16.mxu0 0
    %505 = vmatpush1.bf16.msra.mxu0 0
    %506 = vmatprep.subr.bf16.mxu0 0
    %507 = vmatpush1.bf16.msra.mxu0 0
    %508 = vmatprep.subr.bf16.mxu0 0
    %509 = vmatpush1.bf16.msra.mxu0 0
    %510 = vmatprep.subr.bf16.mxu0 0
    %511 = vmatpush1.bf16.msra.mxu0 0
    %512 = vmatprep.mubr.bf16.mxu0 %v475
    %513 = vmatmul.mubr.bf16.gmra.mrb[0].mxu0 %v372
    %v514 = vpop.f32.mrb[0].mxu0
    %v515 = vadd.f32 0.0, %v514
    %v516 = vpop.f32.mrb[0].mxu0
    %v517 = vpop.f32.mrb[0].mxu0
    %v518 = vadd.f32 0.0, %v517
    %v519 = vpop.f32.mrb[0].mxu0
    %520 = vmatprep.mubr.bf16.mxu0 %v478
    %521 = vmatmul.mubr.bf16.gmra.mrb[0].mxu0 %v376
    %v522 = vpop.f32.mrb[0].mxu0
    %v523 = vadd.f32 0.0, %v522
    %v524 = vpop.f32.mrb[0].mxu0
    %v525 = vpop.f32.mrb[0].mxu0
    %v526 = vadd.f32 0.0, %v525
    %v527 = vpop.f32.mrb[0].mxu0
    %528 = vdwg.mxu0
    %v529 = vadd.f32 %v515, %v518
    %v530 = vadd.f32 %v529, %v523
    %v531 = vadd.f32 %v530, %v526
    %v532 = vrot.slane %v531, 4
    %v533 = vadd.f32 %v531, %v532
    %v534 = vrot.slane %v533, 2
    %v535 = vadd.f32 %v533, %v534
    %v536 = vrot.slane %v535, 1
    %v537 = vadd.f32 %v535, %v536
    %v538 = vmul.f32 %v515, %v515
    %v539 = vmul.f32 %v518, %v518
    %v540 = vmul.f32 %v523, %v523
    %v541 = vmul.f32 %v526, %v526
    %v542 = vadd.f32 %v538, %v539
    %v543 = vadd.f32 %v542, %v540
    %v544 = vadd.f32 %v543, %v541
    %v545 = vrot.slane %v544, 4
    %v546 = vadd.f32 %v544, %v545
    %v547 = vrot.slane %v546, 2
    %v548 = vadd.f32 %v546, %v547
    %v549 = vrot.slane %v548, 1
    %v550 = vadd.f32 %v548, %v549
    %vm551 = vcmask 1040384
    %v552 = vsel %vm551, %v537, %v550
    %553 = vmatprep.subr.mxu0 0.0
    %554 = vmatpush1.msra.mxu0 %v312
    %555 = vmatprep.subr.mxu0 0.0
    %556 = vmatpush1.msra.mxu0 %v313
    %557 = vmatprep.subr.mxu0 0.0
    %558 = vmatpush1.msra.mxu0 %v314
    %559 = vmatprep.subr.mxu0 0.0
    %560 = vmatpush1.msra.mxu0 %v315
    %561 = vmatprep.subr.mxu0 0.0
    %562 = vmatpush1.msra.mxu0 %v316
    %563 = vmatprep.subr.mxu0 0.0
    %564 = vmatpush1.msra.mxu0 %v317
    %565 = vmatprep.subr.mxu0 0.0
    %566 = vmatpush1.msra.mxu0 %v318
    %567 = vmatprep.subr.mxu0 0.0
    %568 = vmatpush1.msra.mxu0 %v319
    %569 = vmatprep.subr.mxu0 0.0
    %570 = vmatpush1.msra.mxu0 %v320
    %571 = vmatprep.subr.mxu0 0.0
    %572 = vmatpush1.msra.mxu0 %v321
    %573 = vmatprep.subr.mxu0 0.0
    %574 = vmatpush1.msra.mxu0 %v322
    %575 = vmatprep.subr.mxu0 0.0
    %576 = vmatpush1.msra.mxu0 %v323
    %577 = vmatprep.subr.mxu0 0.0
    %578 = vmatpush1.msra.mxu0 %v324
    %579 = vmatprep.subr.mxu0 0.0
    %580 = vmatpush1.msra.mxu0 %v325
    %581 = vmatprep.subr.mxu0 0.0
    %582 = vmatpush1.msra.mxu0 %v326
    %583 = vmatprep.subr.mxu0 0.0
    %584 = vmatpush1.msra.mxu0 %v327
    %585 = vmatprep.subr.mxu0 0.0
    %586 = vmatpush1.msra.mxu0 0.0
    %587 = vmatprep.subr.mxu0 0.0
    %588 = vmatpush1.msra.mxu0 0.0
    %589 = vmatprep.subr.mxu0 0.0
    %590 = vmatpush1.msra.mxu0 0.0
    %591 = vmatprep.subr.mxu0 0.0
    %592 = vmatpush1.msra.mxu0 0.0
    %593 = vmatprep.subr.mxu0 0.0
    %594 = vmatpush1.msra.mxu0 0.0
    %595 = vmatprep.subr.mxu0 0.0
    %596 = vmatpush1.msra.mxu0 0.0
    %597 = vmatprep.subr.mxu0 0.0
    %598 = vmatpush1.msra.mxu0 0.0
    %599 = vmatprep.subr.mxu0 0.0
    %600 = vmatpush1.msra.mxu0 0.0
    %601 = vmatprep.subr.mxu0 0.0
    %602 = vmatpush1.msra.mxu0 0.0
    %603 = vmatprep.subr.mxu0 0.0
    %604 = vmatpush1.msra.mxu0 0.0
    %605 = vmatprep.subr.mxu0 0.0
    %606 = vmatpush1.msra.mxu0 0.0
    %607 = vmatprep.subr.mxu0 0.0
    %608 = vmatpush1.msra.mxu0 0.0
    %609 = vmatprep.subr.mxu0 0.0
    %610 = vmatpush1.msra.mxu0 0.0
    %611 = vmatprep.subr.mxu0 0.0
    %612 = vmatpush1.msra.mxu0 0.0
    %613 = vmatprep.subr.mxu0 0.0
    %614 = vmatpush1.msra.mxu0 0.0
    %615 = vmatprep.subr.mxu0 0.0
    %616 = vmatpush1.msra.mxu0 0.0
    %617 = vmatprep.mubr.f32.mxu0 0.0
    %618 = vmatmul.mubr.f32.gmra.mrb[0].mxu0 %v552
    %v619 = vpop.f32.mrb[0].mxu0
    %v620 = vadd.f32 0.0, %v619
    %v621 = vpop.f32.mrb[0].mxu0
    %622 = vdwg.mxu0
    %v623 = vmul.f32 %v620, 0.001953125
    %v624 = vmul.f32 %v623, %v623
    %v626 = vrot.slane %v624, 7
    %v628 = vsub.f32 %v623, %v626
    %v629 = vmax.f32 %v628, 0.0
    %v630 = vld [vmem:[%s8] sm:$0x1]
    %v631 = vadd.f32 %v629, 1e-05
    %v632 = vrsqrt.pop %v631
    %v635 = vunpack.c.l.s4 1966171168
    %v636 = vunpack.c.0.s8 %v635
    %v637 = vlaneseq
    %v638 = vshrl.u32 %v637, 7
    %v639 = vsub.s32 %v636, %v638
    %v640 = vrot.slane %v632, %v639
    %v641 = vcombine.high %v640, %v640
    %v643 = vunpack.c.l.s4 1966171168
    %v644 = vunpack.c.0.s8 %v643
    %v645 = vlaneseq
    %v646 = vshrl.u32 %v645, 7
    %v647 = vsub.s32 %v644, %v646
    %v648 = vrot.slane %v641, %v647
    %v650 = vmul.f32 %v630, %v648
    %v651 = vld [vmem:[%s9] sm:$0x1]
    %v652 = vmul.f32 %v623, %v650
    %v653 = vsub.f32 %v651, %v652
    %v655 = vlaneseq
    %v656 = vshrl.u32 %v655, 7
    %v657 = vsub.s32 0, %v656
    %v658 = vrot.slane %v653, %v657
    %v660 = vsel %vm551, %v650, %v658
    %vm661 = vcmask 64512
    %v663 = vsel %vm661, %v660, 0
    %665 = vmatprep.subr.mxu0 0.0
    %666 = vmatpush1.msra.mxu0 %v328
    %667 = vmatprep.subr.mxu0 0.0
    %668 = vmatpush1.msra.mxu0 0.0
    %669 = vmatprep.subr.mxu0 0.0
    %670 = vmatpush1.msra.mxu0 0.0
    %671 = vmatprep.subr.mxu0 0.0
    %672 = vmatpush1.msra.mxu0 0.0
    %673 = vmatprep.subr.mxu0 0.0
    %674 = vmatpush1.msra.mxu0 0.0
    %675 = vmatprep.subr.mxu0 0.0
    %676 = vmatpush1.msra.mxu0 0.0
    %677 = vmatprep.subr.mxu0 0.0
    %678 = vmatpush1.msra.mxu0 0.0
    %679 = vmatprep.subr.mxu0 0.0
    %680 = vmatpush1.msra.mxu0 0.0
    %681 = vmatprep.subr.mxu0 0.0
    %682 = vmatpush1.msra.mxu0 0.0
    %683 = vmatprep.subr.mxu0 0.0
    %684 = vmatpush1.msra.mxu0 0.0
    %685 = vmatprep.subr.mxu0 0.0
    %686 = vmatpush1.msra.mxu0 0.0
    %687 = vmatprep.subr.mxu0 0.0
    %688 = vmatpush1.msra.mxu0 0.0
    %689 = vmatprep.subr.mxu0 0.0
    %690 = vmatpush1.msra.mxu0 0.0
    %691 = vmatprep.subr.mxu0 0.0
    %692 = vmatpush1.msra.mxu0 0.0
    %693 = vmatprep.subr.mxu0 0.0
    %694 = vmatpush1.msra.mxu0 0.0
    %695 = vmatprep.subr.mxu0 0.0
    %696 = vmatpush1.msra.mxu0 0.0
    %697 = vmatprep.subr.mxu0 0.0
    %698 = vmatpush1.msra.mxu0 0.0
    %699 = vmatprep.subr.mxu0 0.0
    %700 = vmatpush1.msra.mxu0 0.0
    %701 = vmatprep.subr.mxu0 0.0
    %702 = vmatpush1.msra.mxu0 0.0
    %703 = vmatprep.subr.mxu0 0.0
    %704 = vmatpush1.msra.mxu0 0.0
    %705 = vmatprep.subr.mxu0 0.0
    %706 = vmatpush1.msra.mxu0 0.0
    %707 = vmatprep.subr.mxu0 0.0
    %708 = vmatpush1.msra.mxu0 0.0
    %709 = vmatprep.subr.mxu0 0.0
    %710 = vmatpush1.msra.mxu0 0.0
    %711 = vmatprep.subr.mxu0 0.0
    %712 = vmatpush1.msra.mxu0 0.0
    %713 = vmatprep.subr.mxu0 0.0
    %714 = vmatpush1.msra.mxu0 0.0
    %715 = vmatprep.subr.mxu0 0.0
    %716 = vmatpush1.msra.mxu0 0.0
    %717 = vmatprep.subr.mxu0 0.0
    %718 = vmatpush1.msra.mxu0 0.0
    %719 = vmatprep.subr.mxu0 0.0
    %720 = vmatpush1.msra.mxu0 0.0
    %721 = vmatprep.subr.mxu0 0.0
    %722 = vmatpush1.msra.mxu0 0.0
    %723 = vmatprep.subr.mxu0 0.0
    %724 = vmatpush1.msra.mxu0 0.0
    %725 = vmatprep.subr.mxu0 0.0
    %726 = vmatpush1.msra.mxu0 0.0
    %727 = vmatprep.subr.mxu0 0.0
    %728 = vmatpush1.msra.mxu0 0.0
    %729 = vmatprep.mubr.f32.mxu0 0.0
    %730 = vmatmul.mubr.f32.gmra.mrb[0].mxu0 %v663
    %v731 = vpop.f32.mrb[0].mxu0
    %v732 = vadd.f32 0.0, %v731
    %v733 = vpop.f32.mrb[0].mxu0
    %734 = vdwg.mxu0
    %v735 = vlaneseq
    %v736 = vshrl.u32 %v735, 7
    %v737 = vsub.s32 0, %v736
    %v738 = vrot.slane %v732, %v737
    %v739 = vmul.f32 %v515, %v738
    %v740 = vmul.f32 %v518, %v738
    %v741 = vmul.f32 %v523, %v738
    %v742 = vmul.f32 %v526, %v738
    %v743 = vlaneseq
    %v744 = vshrl.u32 %v743, 7
    %v745 = vsub.s32 1, %v744
    %v746 = vrot.slane %v732, %v745
    %v747 = vadd.f32 %v739, %v746
    %v748 = vadd.f32 %v740, %v746
    %v749 = vadd.f32 %v741, %v746
    %v750 = vadd.f32 %v742, %v746
    %v751 = vmax.f32 %v747, 0.0
    %v752 = vmax.f32 %v748, 0.0
    %v753 = vmax.f32 %v749, 0.0
    %v754 = vmax.f32 %v750, 0.0
    %v755 = vpack.c.bf16 %v752, %v751
    %v756 = vpack.c.bf16 %v754, %v753
    %v758 = vshrl.u32 %v755, 16
    %v760 = vrot.slane %v758, 7
    %v761 = vshll.u32 %v755, 16
    %v763 = vor.u32 %v760, %v761
    %v765 = vshrl.u32 %v756, 16
    %v767 = vrot.slane %v765, 7
    %v768 = vshll.u32 %v756, 16
    %v770 = vor.u32 %v767, %v768
    %v773 = vsel %vm349, 0, %v763
    %v774 = vsel %vm349, 0, %v770
    %v775 = vrot.slane %v761, 1
    %v776 = vor.u32 %v758, %v775
    %v777 = vrot.slane %v768, 1
    %v778 = vor.u32 %v765, %v777
    %v781 = vsel %vm360, %v776, 0
    %v782 = vsel %vm360, %v778, 0
    %v783 = vld [vmem:[#allocation2] sm:$0xf]
    %v784 = vld [vmem:[#allocation2 + $0x4] sm:$0xf]
    %v785 = vld [vmem:[#allocation2 + $0x8] sm:$0xf]
    %v786 = vld [vmem:[#allocation2 + $0xc] sm:$0xf]
    %v787 = vld [vmem:[#allocation2 + $0x10] sm:$0xf]
    %v788 = vld [vmem:[#allocation2 + $0x14] sm:$0xf]
    %v789 = vld [vmem:[#allocation2 + $0x18] sm:$0xf]
    %v790 = vld [vmem:[#allocation2 + $0x1c] sm:$0xf]
    %v791 = vld [vmem:[#allocation2 + $0x20] sm:$0xf]
    %v792 = vld [vmem:[#allocation2 + $0x24] sm:$0xf]
    %v793 = vld [vmem:[#allocation2 + $0x28] sm:$0xf]
    %v794 = vld [vmem:[#allocation2 + $0x2c] sm:$0xf]
    %v795 = vld [vmem:[#allocation2 + $0x30] sm:$0xf]
    %v796 = vld [vmem:[#allocation2 + $0x34] sm:$0xf]
    %v797 = vld [vmem:[#allocation2 + $0x38] sm:$0xf]
    %v798 = vld [vmem:[#allocation2 + $0x3c] sm:$0xf]
    %v799 = vld [vmem:[#allocation2 + $0x40] sm:$0xf]
    %v800 = vld [vmem:[#allocation2 + $0x44] sm:$0xf]
    %v801 = vld [vmem:[#allocation2 + $0x48] sm:$0xf]
    %v802 = vld [vmem:[#allocation2 + $0x4c] sm:$0xf]
    %v803 = vld [vmem:[#allocation2 + $0x50] sm:$0xf]
    %v804 = vld [vmem:[#allocation2 + $0x54] sm:$0xf]
    %v805 = vld [vmem:[#allocation2 + $0x58] sm:$0xf]
    %v806 = vld [vmem:[#allocation2 + $0x5c] sm:$0xf]
    %v807 = vld [vmem:[#allocation2 + $0x60] sm:$0xf]
    %v808 = vld [vmem:[#allocation2 + $0x64] sm:$0xf]
    %v809 = vld [vmem:[#allocation2 + $0x68] sm:$0xf]
    %v810 = vld [vmem:[#allocation2 + $0x6c] sm:$0xf]
    %v811 = vld [vmem:[#allocation2 + $0x70] sm:$0xf]
    %v812 = vld [vmem:[#allocation2 + $0x74] sm:$0xf]
    %v813 = vld [vmem:[#allocation2 + $0x78] sm:$0xf]
    %v814 = vld [vmem:[#allocation2 + $0x7c] sm:$0xf]
    %v815 = vld [vmem:[#allocation2 + $0x80] sm:$0xf]
    %v816 = vld [vmem:[#allocation2 + $0x84] sm:$0xf]
    %v817 = vld [vmem:[#allocation2 + $0x88] sm:$0xf]
    %v818 = vld [vmem:[#allocation2 + $0x8c] sm:$0xf]
    %v819 = vld [vmem:[#allocation2 + $0x90] sm:$0xf]
    %v820 = vld [vmem:[#allocation2 + $0x94] sm:$0xf]
    %v821 = vld [vmem:[#allocation2 + $0x98] sm:$0xf]
    %v822 = vld [vmem:[#allocation2 + $0x9c] sm:$0xf]
    %v823 = vld [vmem:[#allocation2 + $0xa0] sm:$0xf]
    %v824 = vld [vmem:[#allocation2 + $0xa4] sm:$0xf]
    %v825 = vld [vmem:[#allocation2 + $0xa8] sm:$0xf]
    %v826 = vld [vmem:[#allocation2 + $0xac] sm:$0xf]
    %v827 = vld [vmem:[#allocation2 + $0xb0] sm:$0xf]
    %v828 = vld [vmem:[#allocation2 + $0xb4] sm:$0xf]
    %v829 = vld [vmem:[#allocation2 + $0xb8] sm:$0xf]
    %v830 = vld [vmem:[#allocation2 + $0xbc] sm:$0xf]
    %v879 = vunpack.c.l.b16 %v783
    %v880 = vunpack.c.l.b16 %v784
    %v881 = vunpack.c.l.b16 %v785
    %v882 = vunpack.c.l.b16 %v786
    %v883 = vunpack.c.l.b16 %v787
    %v884 = vunpack.c.l.b16 %v788
    %v885 = vunpack.c.l.b16 %v789
    %v886 = vunpack.c.l.b16 %v790
    %v887 = vunpack.c.l.b16 %v791
    %v888 = vunpack.c.l.b16 %v792
    %v889 = vunpack.c.l.b16 %v793
    %v890 = vunpack.c.l.b16 %v794
    %v891 = vunpack.c.l.b16 %v795
    %v892 = vunpack.c.l.b16 %v796
    %v893 = vunpack.c.l.b16 %v797
    %v894 = vunpack.c.l.b16 %v798
    %v895 = vunpack.c.l.b16 %v799
    %v896 = vunpack.c.l.b16 %v800
    %v897 = vunpack.c.l.b16 %v801
    %v898 = vunpack.c.l.b16 %v802
    %v899 = vunpack.c.l.b16 %v803
    %v900 = vunpack.c.l.b16 %v804
    %v901 = vunpack.c.l.b16 %v805
    %v902 = vunpack.c.l.b16 %v806
    %v903 = vunpack.c.l.b16 %v807
    %v904 = vunpack.c.l.b16 %v808
    %v905 = vunpack.c.l.b16 %v809
    %v906 = vunpack.c.l.b16 %v810
    %v907 = vunpack.c.l.b16 %v811
    %v908 = vunpack.c.l.b16 %v812
    %v909 = vunpack.c.l.b16 %v813
    %v910 = vunpack.c.l.b16 %v814
    %v911 = vunpack.c.l.b16 %v815
    %v912 = vunpack.c.l.b16 %v816
    %v913 = vunpack.c.l.b16 %v817
    %v914 = vunpack.c.l.b16 %v818
    %v915 = vunpack.c.l.b16 %v819
    %v916 = vunpack.c.l.b16 %v820
    %v917 = vunpack.c.l.b16 %v821
    %v918 = vunpack.c.l.b16 %v822
    %v919 = vunpack.c.l.b16 %v823
    %v920 = vunpack.c.l.b16 %v824
    %v921 = vunpack.c.l.b16 %v825
    %v922 = vunpack.c.l.b16 %v826
    %v923 = vunpack.c.l.b16 %v827
    %v924 = vunpack.c.l.b16 %v828
    %v925 = vunpack.c.l.b16 %v829
    %v926 = vunpack.c.l.b16 %v830
    %v927 = vpack.c.b16 %v880, %v879
    %v928 = vpack.c.b16 %v882, %v881
    %v929 = vpack.c.b16 %v884, %v883
    %v930 = vpack.c.b16 %v886, %v885
    %v931 = vpack.c.b16 %v888, %v887
    %v932 = vpack.c.b16 %v890, %v889
    %v933 = vpack.c.b16 %v892, %v891
    %v934 = vpack.c.b16 %v894, %v893
    %v935 = vpack.c.b16 %v896, %v895
    %v936 = vpack.c.b16 %v898, %v897
    %v937 = vpack.c.b16 %v900, %v899
    %v938 = vpack.c.b16 %v902, %v901
    %v939 = vpack.c.b16 %v904, %v903
    %v940 = vpack.c.b16 %v906, %v905
    %v941 = vpack.c.b16 %v908, %v907
    %v942 = vpack.c.b16 %v910, %v909
    %v943 = vpack.c.b16 %v912, %v911
    %v944 = vpack.c.b16 %v914, %v913
    %v945 = vpack.c.b16 %v916, %v915
    %v946 = vpack.c.b16 %v918, %v917
    %v947 = vpack.c.b16 %v920, %v919
    %v948 = vpack.c.b16 %v922, %v921
    %v949 = vpack.c.b16 %v924, %v923
    %v950 = vpack.c.b16 %v926, %v925
    %975 = vmatprep.subr.bf16.mxu0 0
    %976 = vmatpush1.bf16.msra.mxu0 %v927
    %977 = vmatprep.subr.bf16.mxu0 0
    %978 = vmatpush1.bf16.msra.mxu0 %v928
    %979 = vmatprep.subr.bf16.mxu0 0
    %980 = vmatpush1.bf16.msra.mxu0 %v929
    %981 = vmatprep.subr.bf16.mxu0 0
    %982 = vmatpush1.bf16.msra.mxu0 %v930
    %983 = vmatprep.subr.bf16.mxu0 0
    %984 = vmatpush1.bf16.msra.mxu0 %v931
    %985 = vmatprep.subr.bf16.mxu0 0
    %986 = vmatpush1.bf16.msra.mxu0 %v932
    %987 = vmatprep.subr.bf16.mxu0 0
    %988 = vmatpush1.bf16.msra.mxu0 %v933
    %989 = vmatprep.subr.bf16.mxu0 0
    %990 = vmatpush1.bf16.msra.mxu0 %v934
    %991 = vmatprep.subr.bf16.mxu0 0
    %992 = vmatpush1.bf16.msra.mxu0 %v935
    %993 = vmatprep.subr.bf16.mxu0 0
    %994 = vmatpush1.bf16.msra.mxu0 %v936
    %995 = vmatprep.subr.bf16.mxu0 0
    %996 = vmatpush1.bf16.msra.mxu0 %v937
    %997 = vmatprep.subr.bf16.mxu0 0
    %998 = vmatpush1.bf16.msra.mxu0 %v938
    %999 = vmatprep.subr.bf16.mxu0 0
    %1000 = vmatpush1.bf16.msra.mxu0 %v939
    %1001 = vmatprep.subr.bf16.mxu0 0
    %1002 = vmatpush1.bf16.msra.mxu0 %v940
    %1003 = vmatprep.subr.bf16.mxu0 0
    %1004 = vmatpush1.bf16.msra.mxu0 %v941
    %1005 = vmatprep.subr.bf16.mxu0 0
    %1006 = vmatpush1.bf16.msra.mxu0 %v942
    %1007 = vmatprep.mubr.bf16.mxu0 %v755
    %1008 = vmatmul.mubr.bf16.gmra.mrb[0].mxu0 %v773
    %v1009 = vpop.f32.mrb[0].mxu0
    %v1010 = vadd.f32 0.0, %v1009
    %v1011 = vpop.f32.mrb[0].mxu0
    %v1012 = vpop.f32.mrb[0].mxu0
    %v1013 = vadd.f32 0.0, %v1012
    %v1014 = vpop.f32.mrb[0].mxu0
    %1015 = vmatprep.mubr.bf16.mxu0 %v756
    %1016 = vmatmul.mubr.bf16.gmra.mrb[0].mxu0 %v774
    %v1017 = vpop.f32.mrb[0].mxu0
    %v1018 = vadd.f32 0.0, %v1017
    %v1019 = vpop.f32.mrb[0].mxu0
    %v1020 = vpop.f32.mrb[0].mxu0
    %v1021 = vadd.f32 0.0, %v1020
    %v1022 = vpop.f32.mrb[0].mxu0
    %1023 = vdwg.mxu0
    %1024 = vmatprep.subr.bf16.mxu0 0
    %1025 = vmatpush1.bf16.msra.mxu0 %v943
    %1026 = vmatprep.subr.bf16.mxu0 0
    %1027 = vmatpush1.bf16.msra.mxu0 %v944
    %1028 = vmatprep.subr.bf16.mxu0 0
    %1029 = vmatpush1.bf16.msra.mxu0 %v945
    %1030 = vmatprep.subr.bf16.mxu0 0
    %1031 = vmatpush1.bf16.msra.mxu0 %v946
    %1032 = vmatprep.subr.bf16.mxu0 0
    %1033 = vmatpush1.bf16.msra.mxu0 %v947
    %1034 = vmatprep.subr.bf16.mxu0 0
    %1035 = vmatpush1.bf16.msra.mxu0 %v948
    %1036 = vmatprep.subr.bf16.mxu0 0
    %1037 = vmatpush1.bf16.msra.mxu0 %v949
    %1038 = vmatprep.subr.bf16.mxu0 0
    %1039 = vmatpush1.bf16.msra.mxu0 %v950
    %1040 = vmatprep.subr.bf16.mxu0 0
    %1041 = vmatpush1.bf16.msra.mxu0 0
    %1042 = vmatprep.subr.bf16.mxu0 0
    %1043 = vmatpush1.bf16.msra.mxu0 0
    %1044 = vmatprep.subr.bf16.mxu0 0
    %1045 = vmatpush1.bf16.msra.mxu0 0
    %1046 = vmatprep.subr.bf16.mxu0 0
    %1047 = vmatpush1.bf16.msra.mxu0 0
    %1048 = vmatprep.subr.bf16.mxu0 0
    %1049 = vmatpush1.bf16.msra.mxu0 0
    %1050 = vmatprep.subr.bf16.mxu0 0
    %1051 = vmatpush1.bf16.msra.mxu0 0
    %1052 = vmatprep.subr.bf16.mxu0 0
    %1053 = vmatpush1.bf16.msra.mxu0 0
    %1054 = vmatprep.subr.bf16.mxu0 0
    %1055 = vmatpush1.bf16.msra.mxu0 0
    %1056 = vmatprep.mubr.bf16.mxu0 0
    %1057 = vmatmul.mubr.bf16.gmra.mrb[0].mxu0 %v781
    %v1058 = vpop.f32.mrb[0].mxu0
    %v1059 = vadd.f32 %v1010, %v1058
    %v1060 = vpop.f32.mrb[0].mxu0
    %v1061 = vpop.f32.mrb[0].mxu0
    %v1062 = vadd.f32 %v1013, %v1061
    %v1063 = vpop.f32.mrb[0].mxu0
    %1064 = vmatprep.mubr.bf16.mxu0 0
    %1065 = vmatmul.mubr.bf16.gmra.mrb[0].mxu0 %v782
    %v1066 = vpop.f32.mrb[0].mxu0
    %v1067 = vadd.f32 %v1018, %v1066
    %v1068 = vpop.f32.mrb[0].mxu0
    %v1069 = vpop.f32.mrb[0].mxu0
    %v1070 = vadd.f32 %v1021, %v1069
    %v1071 = vpop.f32.mrb[0].mxu0
    %1072 = vdwg.mxu0
    %v1073 = vadd.f32 %v1059, %v1062
    %v1074 = vadd.f32 %v1073, %v1067
    %v1075 = vadd.f32 %v1074, %v1070
    %v1076 = vrot.slane %v1075, 4
    %v1077 = vadd.f32 %v1075, %v1076
    %v1078 = vrot.slane %v1077, 2
    %v1079 = vadd.f32 %v1077, %v1078
    %v1080 = vrot.slane %v1079, 1
    %v1081 = vadd.f32 %v1079, %v1080
    %v1082 = vmul.f32 %v1059, %v1059
    %v1083 = vmul.f32 %v1062, %v1062
    %v1084 = vmul.f32 %v1067, %v1067
    %v1085 = vmul.f32 %v1070, %v1070
    %v1086 = vadd.f32 %v1082, %v1083
    %v1087 = vadd.f32 %v1086, %v1084
    %v1088 = vadd.f32 %v1087, %v1085
    %v1089 = vrot.slane %v1088, 4
    %v1090 = vadd.f32 %v1088, %v1089
    %v1091 = vrot.slane %v1090, 2
    %v1092 = vadd.f32 %v1090, %v1091
    %v1093 = vrot.slane %v1092, 1
    %v1094 = vadd.f32 %v1092, %v1093
    %v1095 = vsel %vm551, %v1081, %v1094
    %1096 = vmatprep.subr.mxu0 0.0
    %1097 = vmatpush1.msra.mxu0 %v312
    %1098 = vmatprep.subr.mxu0 0.0
    %1099 = vmatpush1.msra.mxu0 %v313
    %1100 = vmatprep.subr.mxu0 0.0
    %1101 = vmatpush1.msra.mxu0 %v314
    %1102 = vmatprep.subr.mxu0 0.0
    %1103 = vmatpush1.msra.mxu0 %v315
    %1104 = vmatprep.subr.mxu0 0.0
    %1105 = vmatpush1.msra.mxu0 %v316
    %1106 = vmatprep.subr.mxu0 0.0
    %1107 = vmatpush1.msra.mxu0 %v317
    %1108 = vmatprep.subr.mxu0 0.0
    %1109 = vmatpush1.msra.mxu0 %v318
    %1110 = vmatprep.subr.mxu0 0.0
    %1111 = vmatpush1.msra.mxu0 %v319
    %1112 = vmatprep.subr.mxu0 0.0
    %1113 = vmatpush1.msra.mxu0 %v320
    %1114 = vmatprep.subr.mxu0 0.0
    %1115 = vmatpush1.msra.mxu0 %v321
    %1116 = vmatprep.subr.mxu0 0.0
    %1117 = vmatpush1.msra.mxu0 %v322
    %1118 = vmatprep.subr.mxu0 0.0
    %1119 = vmatpush1.msra.mxu0 %v323
    %1120 = vmatprep.subr.mxu0 0.0
    %1121 = vmatpush1.msra.mxu0 %v324
    %1122 = vmatprep.subr.mxu0 0.0
    %1123 = vmatpush1.msra.mxu0 %v325
    %1124 = vmatprep.subr.mxu0 0.0
    %1125 = vmatpush1.msra.mxu0 %v326
    %1126 = vmatprep.subr.mxu0 0.0
    %1127 = vmatpush1.msra.mxu0 %v327
    %1128 = vmatprep.subr.mxu0 0.0
    %1129 = vmatpush1.msra.mxu0 0.0
    %1130 = vmatprep.subr.mxu0 0.0
    %1131 = vmatpush1.msra.mxu0 0.0
    %1132 = vmatprep.subr.mxu0 0.0
    %1133 = vmatpush1.msra.mxu0 0.0
    %1134 = vmatprep.subr.mxu0 0.0
    %1135 = vmatpush1.msra.mxu0 0.0
    %1136 = vmatprep.subr.mxu0 0.0
    %1137 = vmatpush1.msra.mxu0 0.0
    %1138 = vmatprep.subr.mxu0 0.0
    %1139 = vmatpush1.msra.mxu0 0.0
    %1140 = vmatprep.subr.mxu0 0.0
    %1141 = vmatpush1.msra.mxu0 0.0
    %1142 = vmatprep.subr.mxu0 0.0
    %1143 = vmatpush1.msra.mxu0 0.0
    %1144 = vmatprep.subr.mxu0 0.0
    %1145 = vmatpush1.msra.mxu0 0.0
    %1146 = vmatprep.subr.mxu0 0.0
    %1147 = vmatpush1.msra.mxu0 0.0
    %1148 = vmatprep.subr.mxu0 0.0
    %1149 = vmatpush1.msra.mxu0 0.0
    %1150 = vmatprep.subr.mxu0 0.0
    %1151 = vmatpush1.msra.mxu0 0.0
    %1152 = vmatprep.subr.mxu0 0.0
    %1153 = vmatpush1.msra.mxu0 0.0
    %1154 = vmatprep.subr.mxu0 0.0
    %1155 = vmatpush1.msra.mxu0 0.0
    %1156 = vmatprep.subr.mxu0 0.0
    %1157 = vmatpush1.msra.mxu0 0.0
    %1158 = vmatprep.subr.mxu0 0.0
    %1159 = vmatpush1.msra.mxu0 0.0
    %1160 = vmatprep.mubr.f32.mxu0 0.0
    %1161 = vmatmul.mubr.f32.gmra.mrb[0].mxu0 %v1095
    %v1162 = vpop.f32.mrb[0].mxu0
    %v1163 = vadd.f32 0.0, %v1162
    %v1164 = vpop.f32.mrb[0].mxu0
    %1165 = vdwg.mxu0
    %v1166 = vmul.f32 %v1163, 0.001953125
    %v1167 = vmul.f32 %v1166, %v1166
    %v1169 = vrot.slane %v1167, 7
    %v1171 = vsub.f32 %v1166, %v1169
    %v1172 = vmax.f32 %v1171, 0.0
    %v1173 = vld [vmem:[%s11] sm:$0x1]
    %v1174 = vadd.f32 %v1172, 1e-05
    %v1175 = vrsqrt.pop %v1174
    %v1178 = vunpack.c.l.s4 1966171168
    %v1179 = vunpack.c.0.s8 %v1178
    %v1180 = vlaneseq
    %v1181 = vshrl.u32 %v1180, 7
    %v1182 = vsub.s32 %v1179, %v1181
    %v1183 = vrot.slane %v1175, %v1182
    %v1184 = vcombine.high %v1183, %v1183
    %v1186 = vunpack.c.l.s4 1966171168
    %v1187 = vunpack.c.0.s8 %v1186
    %v1188 = vlaneseq
    %v1189 = vshrl.u32 %v1188, 7
    %v1190 = vsub.s32 %v1187, %v1189
    %v1191 = vrot.slane %v1184, %v1190
    %v1193 = vmul.f32 %v1173, %v1191
    %v1194 = vld [vmem:[%s12] sm:$0x1]
    %v1195 = vmul.f32 %v1166, %v1193
    %v1196 = vsub.f32 %v1194, %v1195
    %v1198 = vlaneseq
    %v1199 = vshrl.u32 %v1198, 7
    %v1200 = vsub.s32 0, %v1199
    %v1201 = vrot.slane %v1196, %v1200
    %v1203 = vsel %vm551, %v1193, %v1201
    %v1205 = vsel %vm661, %v1203, 0
    %1207 = vmatprep.subr.mxu0 0.0
    %1208 = vmatpush1.msra.mxu0 %v328
    %1209 = vmatprep.subr.mxu0 0.0
    %1210 = vmatpush1.msra.mxu0 0.0
    %1211 = vmatprep.subr.mxu0 0.0
    %1212 = vmatpush1.msra.mxu0 0.0
    %1213 = vmatprep.subr.mxu0 0.0
    %1214 = vmatpush1.msra.mxu0 0.0
    %1215 = vmatprep.subr.mxu0 0.0
    %1216 = vmatpush1.msra.mxu0 0.0
    %1217 = vmatprep.subr.mxu0 0.0
    %1218 = vmatpush1.msra.mxu0 0.0
    %1219 = vmatprep.subr.mxu0 0.0
    %1220 = vmatpush1.msra.mxu0 0.0
    %1221 = vmatprep.subr.mxu0 0.0
    %1222 = vmatpush1.msra.mxu0 0.0
    %1223 = vmatprep.subr.mxu0 0.0
    %1224 = vmatpush1.msra.mxu0 0.0
    %1225 = vmatprep.subr.mxu0 0.0
    %1226 = vmatpush1.msra.mxu0 0.0
    %1227 = vmatprep.subr.mxu0 0.0
    %1228 = vmatpush1.msra.mxu0 0.0
    %1229 = vmatprep.subr.mxu0 0.0
    %1230 = vmatpush1.msra.mxu0 0.0
    %1231 = vmatprep.subr.mxu0 0.0
    %1232 = vmatpush1.msra.mxu0 0.0
    %1233 = vmatprep.subr.mxu0 0.0
    %1234 = vmatpush1.msra.mxu0 0.0
    %1235 = vmatprep.subr.mxu0 0.0
    %1236 = vmatpush1.msra.mxu0 0.0
    %1237 = vmatprep.subr.mxu0 0.0
    %1238 = vmatpush1.msra.mxu0 0.0
    %1239 = vmatprep.subr.mxu0 0.0
    %1240 = vmatpush1.msra.mxu0 0.0
    %1241 = vmatprep.subr.mxu0 0.0
    %1242 = vmatpush1.msra.mxu0 0.0
    %1243 = vmatprep.subr.mxu0 0.0
    %1244 = vmatpush1.msra.mxu0 0.0
    %1245 = vmatprep.subr.mxu0 0.0
    %1246 = vmatpush1.msra.mxu0 0.0
    %1247 = vmatprep.subr.mxu0 0.0
    %1248 = vmatpush1.msra.mxu0 0.0
    %1249 = vmatprep.subr.mxu0 0.0
    %1250 = vmatpush1.msra.mxu0 0.0
    %1251 = vmatprep.subr.mxu0 0.0
    %1252 = vmatpush1.msra.mxu0 0.0
    %1253 = vmatprep.subr.mxu0 0.0
    %1254 = vmatpush1.msra.mxu0 0.0
    %1255 = vmatprep.subr.mxu0 0.0
    %1256 = vmatpush1.msra.mxu0 0.0
    %1257 = vmatprep.subr.mxu0 0.0
    %1258 = vmatpush1.msra.mxu0 0.0
    %1259 = vmatprep.subr.mxu0 0.0
    %1260 = vmatpush1.msra.mxu0 0.0
    %1261 = vmatprep.subr.mxu0 0.0
    %1262 = vmatpush1.msra.mxu0 0.0
    %1263 = vmatprep.subr.mxu0 0.0
    %1264 = vmatpush1.msra.mxu0 0.0
    %1265 = vmatprep.subr.mxu0 0.0
    %1266 = vmatpush1.msra.mxu0 0.0
    %1267 = vmatprep.subr.mxu0 0.0
    %1268 = vmatpush1.msra.mxu0 0.0
    %1269 = vmatprep.subr.mxu0 0.0
    %1270 = vmatpush1.msra.mxu0 0.0
    %1271 = vmatprep.mubr.f32.mxu0 0.0
    %1272 = vmatmul.mubr.f32.gmra.mrb[0].mxu0 %v1205
    %v1273 = vpop.f32.mrb[0].mxu0
    %v1274 = vadd.f32 0.0, %v1273
    %v1275 = vpop.f32.mrb[0].mxu0
    %1276 = vdwg.mxu0
    %v1277 = vlaneseq
    %v1278 = vshrl.u32 %v1277, 7
    %v1279 = vsub.s32 0, %v1278
    %v1280 = vrot.slane %v1274, %v1279
    %v1281 = vmul.f32 %v1059, %v1280
    %v1282 = vmul.f32 %v1062, %v1280
    %v1283 = vmul.f32 %v1067, %v1280
    %v1284 = vmul.f32 %v1070, %v1280
    %v1285 = vlaneseq
    %v1286 = vshrl.u32 %v1285, 7
    %v1287 = vsub.s32 1, %v1286
    %v1288 = vrot.slane %v1274, %v1287
    %v1289 = vadd.f32 %v1281, %v1288
    %v1290 = vadd.f32 %v1282, %v1288
    %v1291 = vadd.f32 %v1283, %v1288
    %v1292 = vadd.f32 %v1284, %v1288
    %v1293 = vmax.f32 %v1289, 0.0
    %v1294 = vmax.f32 %v1290, 0.0
    %v1295 = vmax.f32 %v1291, 0.0
    %v1296 = vmax.f32 %v1292, 0.0
    %1297 = vst [vmem:[#allocation5] sm:$0xff] %v1293
    %1298 = vst [vmem:[#allocation5 + $0x8] sm:$0xff] %v1294
    %1299 = vst [vmem:[#allocation5 + $0x10] sm:$0xff] %v1295
    %1300 = vst [vmem:[#allocation5 + $0x18] sm:$0xff] %v1296
    // Predicated region
    $region66: #{tpu_custom_call.1} parent=1 // pred_check
      _
    $region67: #{tpu_custom_call.1} parent=1 // pred_check_branch
      %1302 = sbr.rel (0) target = $region69
    $region68: #{tpu_custom_call.1} parent=1 // pred_region
      %s1304 = ssub.s32 512, 512
      %1305 = vsyncadd [#allocation4], %s1304
      %s1306 = sshll.u32 [#allocation5], 4
      %s1307 = int_to_ptr.vmem [resolvable:$true] %s1306
      %1312 = dma.vmem_to_hbm [thread:$0]  %s1307, 512, %s15, [#allocation4], 128, 128, 8
    $region69: #{tpu_custom_call.1} parent=1 // pred_fallthru
      _
    // Predicated region
    $region70: #{tpu_custom_call.1} parent=1 // pred_check
      _
    $region71: #{tpu_custom_call.1} parent=1 // pred_check_branch
      %1314 = sbr.rel (0) target = $region73
    $region72: #{tpu_custom_call.1} parent=1 // pred_region
      %1315 = dma.done [#allocation4], 512
    $region73: #{tpu_custom_call.1} parent=1 // pred_fallthru
      _
    %1316 = vsyncpa [#allocation3], 1
    %1317 = vsyncpa [#allocation4], 1

</llo_original>
